<compile_context>
chip_gen: v7x
topology: tpu7x:2x2x1
jax: 0.10.0
libtpu: 0.0.40
codegen_flags: <defaults>
</compile_context>

<pallas_src>
import functools

import jax
import jax.numpy as jnp
from jax import lax
from jax.experimental import pallas as pl
from jax.experimental.pallas import tpu as pltpu

_LANE = 128
_SUBLANE = 8
_NEG_BIG = -1e30


def _round_up(x, m):
    return ((x + m - 1) // m) * m


def _pad2d(a, rows, cols):
    r, c = a.shape
    return jnp.pad(a, ((0, rows - r), (0, cols - c)))


def _tpu_generation():
    kind = ""
    try:
        kind = jax.devices()[0].device_kind.lower()
    except Exception:
        pass
    if "v5" in kind:
        return "v5e"
    if "v7" in kind or "7x" in kind:
        return "v7x"
    return "v6e"


# ----------------------------- fused kernel ---------------------------------


def fused_nca_kernel(
    x_ref, cand_ref, y_ref, bias_ref, w1_ref, b1_ref, w2_ref, b2_ref,   # inputs
    o_ref,                                                               # output
    zq_ref, sqq_ref, m_ref, l_ref, acc_ref,                              # VMEM scratch
    *,
    inv_temperature, take_log, eps, encode_candidates,
):
    j = pl.program_id(1)          # candidate-tile index (reduction axis, last)

    def encode(feat_bf16):        # [rows, d_in_pad] bf16 -> [rows, dim_pad] f32
        h = jnp.dot(feat_bf16, w1_ref[...],
                    preferred_element_type=jnp.float32) + b1_ref[...]
        h = jnp.maximum(h, 0.0)                                   # ReLU
        return jnp.dot(h.astype(jnp.bfloat16), w2_ref[...],
                       preferred_element_type=jnp.float32) + b2_ref[...]

    # Init once per query tile: encode queries, cache |zq|^2, reset softmax state.
    @pl.when(j == 0)
    def _init():
        zq_bf = encode(x_ref[...]).astype(jnp.bfloat16)
        zq_ref[...] = zq_bf
        zqf = zq_bf.astype(jnp.float32)
        sqq_ref[...] = jnp.sum(zqf * zqf, axis=-1, keepdims=True)
        m_ref[...] = jnp.full(m_ref.shape, -jnp.inf, jnp.float32)
        l_ref[...] = jnp.zeros(l_ref.shape, jnp.float32)
        acc_ref[...] = jnp.zeros(acc_ref.shape, jnp.float32)

    if encode_candidates:
        # Single query tile: fuse the candidate encoder (zc never leaves VMEM).
        zc_bf = encode(cand_ref[...]).astype(jnp.bfloat16)
    else:
        # Multiple query tiles: zc was precomputed once; cand_ref IS bf16 zc.
        zc_bf = cand_ref[...]

    # Squared norms computed from the SAME bf16 values that feed the cross matmul
    # so the |a|^2 + |b|^2 - 2ab cancellation is consistent.
    zcf = zc_bf.astype(jnp.float32)
    sq_c = jnp.sum(zcf * zcf, axis=-1)[None, :]                   # [1, tn]
    # Contract the last (lane) axis of both operands -> no zc transpose.
    cross = lax.dot_general(
        zq_ref[...], zc_bf,
        dimension_numbers=(((1,), (1,)), ((), ())),
        preferred_element_type=jnp.float32)                       # [tb, tn]

    d2 = jnp.maximum(sqq_ref[...] + sq_c - 2.0 * cross, 0.0)
    # bias_ref is 0 for valid candidate columns, -1e30 for padded columns.
    s = -jnp.sqrt(d2) * inv_temperature + bias_ref[...]

    # Online softmax update (all f32).
    m_prev = m_ref[...]
    m_new = jnp.maximum(m_prev, jnp.max(s, axis=-1, keepdims=True))
    alpha = jnp.exp(m_prev - m_new)
    p = jnp.exp(s - m_new)                                        # [tb, tn] f32

    l_ref[...] = alpha * l_ref[...] + jnp.sum(p, axis=-1, keepdims=True)
    acc_ref[...] = alpha * acc_ref[...] + jnp.dot(
        p, y_ref[...], preferred_element_type=jnp.float32)        # f32 p @ f32 y
    m_ref[...] = m_new

    @pl.when(j == pl.num_programs(1) - 1)
    def _finalize():
        logits = acc_ref[...] / l_ref[...]      # exact divide (runs once per tile)
        if take_log:
            logits = jnp.log(logits + eps)
        o_ref[...] = logits.astype(o_ref.dtype)


# ----------------------------- wrapper ---------------------------------------


def _vmem_limit_bytes(tb, tn, d_in_pad, dim_pad, cand_cols, d_out, gen):
    est = 0
    est += 2 * tb * d_in_pad * 2                            # x block (bf16, 2 bufs)
    est += 2 * tn * cand_cols * 2                           # cand / zc stream (bf16)
    est += 2 * tn * max(d_out, 1) * 4                       # labels (f32)
    est += 2 * tn * 4                                       # column bias (f32)
    est += 2 * (d_in_pad * dim_pad + dim_pad * dim_pad) * 2  # weights (bf16)
    est += 2 * 2 * dim_pad * 4                              # biases (f32)
    est += 2 * tb * max(d_out, _LANE) * 4                   # output block
    est += tb * dim_pad * 2                                 # zq scratch (bf16)
    est += 3 * tb * _LANE * 4                               # sqq / m / l (lane-padded)
    est += tb * max(d_out, _LANE) * 4                       # acc scratch
    est += 2 * tn * dim_pad * 4 + 2 * tb * tn * 4           # f32 temporaries (h/zc, s/p)
    est = int(est * 1.5) + (4 << 20)
    cap = (48 << 20) if gen == "v7x" else (96 << 20)        # v7x VMEM is 64 MiB physical
    return int(min(max(est, 32 << 20), cap))


def modern_nca_forward(
    params,
    x_num,
    x_cat,
    candidate_x_num,
    candidate_x_cat,
    candidate_y,
    *,
    d_out,
    temperature,
):
    """Mirrors ModernNCA.forward (num_encoder=None, eval-mode dropout=noop)."""
    x = x_num if x_cat is None else jnp.concatenate([x_num, x_cat], axis=1)
    cand = (
        candidate_x_num
        if candidate_x_cat is None
        else jnp.concatenate([candidate_x_num, candidate_x_cat], axis=1)
    )

    w1, b1, w2, b2 = params          # weights already lane-padded (see init_params)
    d_in_pad, dim_pad = w1.shape

    b = x.shape[0]
    n = cand.shape[0]

    if d_out > 1:
        y = jax.nn.one_hot(candidate_y, d_out, dtype=jnp.float32)   # [N, d_out]
        take_log = True
    else:
        y = candidate_y.reshape(-1, 1).astype(jnp.float32)
        take_log = False

    gen = _tpu_generation()
    tb_max = 128 if gen == "v5e" else 256     # 256-wide MXU on v6e/v7x
    tn_max = 1024 if gen == "v5e" else 2048

    tb = min(tb_max, _round_up(b, _SUBLANE))
    tn = min(tn_max, _round_up(n, _LANE))
    b_pad = _round_up(b, tb)
    n_pad = _round_up(n, tn)
    num_q_tiles = b_pad // tb
    num_c_tiles = n_pad // tn

    # Lane-dense, zero-padded streaming inputs.
    x_p = _pad2d(x, b_pad, d_in_pad).astype(jnp.bfloat16)
    # Labels are NOT lane-padded: last dim stays d_out (full-extent block is legal).
    y_p = _pad2d(y, n_pad, d_out).astype(jnp.float32)
    # Additive softmax bias: 0 for valid candidate columns, -1e30 for row padding.
    col_bias = jnp.where(jnp.arange(n_pad) < n, 0.0, _NEG_BIG)
    col_bias = col_bias.astype(jnp.float32).reshape(1, n_pad)

    encode_candidates = (num_q_tiles == 1)
    if encode_candidates:
        cand_stream = _pad2d(cand, n_pad, d_in_pad).astype(jnp.bfloat16)
        cand_cols = d_in_pad
    else:
        # Encode candidates exactly once (plain XLA, same bf16/f32 recipe as the
        # kernel) and stream bf16 zc instead of raw features.
        cand_bf = _pad2d(cand, n_pad, d_in_pad).astype(jnp.bfloat16)
        h = jnp.maximum(
            jnp.dot(cand_bf, w1, preferred_element_type=jnp.float32) + b1, 0.0)
        zc = jnp.dot(h.astype(jnp.bfloat16), w2,
                     preferred_element_type=jnp.float32) + b2
        cand_stream = zc.astype(jnp.bfloat16)
        cand_cols = dim_pad
    # TODO(synk): on v7x, when num_q_tiles == 1 split the candidate axis across the
    # two TensorCores (CORE_PARALLEL leading axis + per-core partial (m, l, acc) and
    # a tiny combine in JAX); currently one core idles for single-query-tile inputs.

    kernel = functools.partial(
        fused_nca_kernel,
        inv_temperature=1.0 / float(temperature),
        take_log=take_log,
        eps=1e-7,
        encode_candidates=encode_candidates,
    )

    def resident(shape):
        # Constant index_map -> DMA'd once, kept resident across the grid.
        # TODO(synk): mark these pipeline_mode=pl.Buffered(1) (single buffer) once
        # confirmed supported by the installed jax; halves resident-weight VMEM.
        return pl.BlockSpec(shape, lambda i, j: (0, 0))

    vmem_limit = _vmem_limit_bytes(tb, tn, d_in_pad, dim_pad, cand_cols, d_out, gen)

    out = pl.pallas_call(
        kernel,
        out_shape=jax.ShapeDtypeStruct((b_pad, d_out), jnp.float32),
        grid=(num_q_tiles, num_c_tiles),
        in_specs=[
            pl.BlockSpec((tb, d_in_pad), lambda i, j: (i, 0)),        # queries
            pl.BlockSpec((tn, cand_cols), lambda i, j: (j, 0)),       # cand feats / zc
            pl.BlockSpec((tn, d_out), lambda i, j: (j, 0)),           # labels (unpadded)
            pl.BlockSpec((1, tn), lambda i, j: (0, j)),               # column bias
            resident((d_in_pad, dim_pad)),                            # w1
            resident((1, dim_pad)),                                   # b1
            resident((dim_pad, dim_pad)),                             # w2
            resident((1, dim_pad)),                                   # b2
        ],
        out_specs=pl.BlockSpec((tb, d_out), lambda i, j: (i, 0)),
        scratch_shapes=[
            pltpu.VMEM((tb, dim_pad), jnp.bfloat16),   # encoded queries (MXU feed)
            pltpu.VMEM((tb, 1), jnp.float32),          # |zq|^2
            pltpu.VMEM((tb, 1), jnp.float32),          # running max m
            pltpu.VMEM((tb, 1), jnp.float32),          # running denom l
            pltpu.VMEM((tb, d_out), jnp.float32),      # logits accumulator
        ],
        compiler_params=pltpu.CompilerParams(
            dimension_semantics=("parallel", "arbitrary"),
            vmem_limit_bytes=vmem_limit,
        ),
    )(x_p, cand_stream, y_p, col_bias, w1, b1, w2, b2)

    logits = out[:b, :d_out]
    # Match torch's `.squeeze()` (drops size-1 dims: d_out==1 and/or B==1).
    return jnp.squeeze(logits)


# ----------------------------- params / reference ----------------------------


def init_params(key, d_in_total, dim):
    """nn.Linear-style init (uniform +-1/sqrt(fan_in)), zero-padded to 128-lane
    shapes once at init. Weights in bf16 (MXU feed), biases in f32."""
    d_in_pad = _round_up(d_in_total, _LANE)
    dim_pad = _round_up(dim, _LANE)
    k1, k2, k3, k4 = jax.random.split(key, 4)
    lim1 = 1.0 / jnp.sqrt(d_in_total)
    lim2 = 1.0 / jnp.sqrt(dim)
    w1 = jax.random.uniform(k1, (d_in_total, dim), jnp.float32, -lim1, lim1)
    b1 = jax.random.uniform(k2, (1, dim), jnp.float32, -lim1, lim1)
    w2 = jax.random.uniform(k3, (dim, dim), jnp.float32, -lim2, lim2)
    b2 = jax.random.uniform(k4, (1, dim), jnp.float32, -lim2, lim2)
    w1 = _pad2d(w1, d_in_pad, dim_pad).astype(jnp.bfloat16)
    b1 = _pad2d(b1, 1, dim_pad)
    w2 = _pad2d(w2, dim_pad, dim_pad).astype(jnp.bfloat16)
    b2 = _pad2d(b2, 1, dim_pad)
    return (w1, b1, w2, b2)


def reference_forward(params, x_num, x_cat, cand_num, cand_cat, cand_y,
                      *, d_out, temperature, d_in_total, dim):
    """Pure-JAX f32 reference matching the PyTorch forward."""
    w1, b1, w2, b2 = params
    w1 = w1[:d_in_total, :dim].astype(jnp.float32)
    b1 = b1[:, :dim]
    w2 = w2[:dim, :dim].astype(jnp.float32)
    b2 = b2[:, :dim]
    x = x_num if x_cat is None else jnp.concatenate([x_num, x_cat], axis=1)
    c = cand_num if cand_cat is None else jnp.concatenate([cand_num, cand_cat], axis=1)
    zq = jnp.maximum(x @ w1 + b1, 0.0) @ w2 + b2
    zc = jnp.maximum(c @ w1 + b1, 0.0) @ w2 + b2
    d2 = (jnp.sum(zq * zq, -1, keepdims=True) + jnp.sum(zc * zc, -1)[None, :]
          - 2.0 * zq @ zc.T)
    dist = jnp.sqrt(jnp.maximum(d2, 0.0)) / temperature
    p = jax.nn.softmax(-dist, axis=-1)
    if d_out > 1:
        y = jax.nn.one_hot(cand_y, d_out, dtype=jnp.float32)
    else:
        y = cand_y.reshape(-1, 1).astype(jnp.float32)
    logits = p @ y
    if d_out > 1:
        logits = jnp.log(logits + 1e-7)
    return jnp.squeeze(logits)


# ----------------------------- main ------------------------------------------


if __name__ == "__main__":
    key = jax.random.PRNGKey(0)

    # --- Test 1: classification, single query tile -> fused candidate encode. ---
    B, N = 8, 64
    d_in_num, d_in_cat = 6, 2
    d_in_total = d_in_num + d_in_cat
    dim, d_out, temperature = 32, 3, 1.0

    kp, kx, kxc, kc, kcc, ky, key = jax.random.split(key, 7)
    params = init_params(kp, d_in_total, dim)
    x_num = jax.random.normal(kx, (B, d_in_num), jnp.float32)
    x_cat = jax.random.normal(kxc, (B, d_in_cat), jnp.float32)
    cand_num = jax.random.normal(kc, (N, d_in_num), jnp.float32)
    cand_cat = jax.random.normal(kcc, (N, d_in_cat), jnp.float32)
    cand_y = jax.random.randint(ky, (N,), 0, d_out, jnp.int32)

    out = modern_nca_forward(params, x_num, x_cat, cand_num, cand_cat, cand_y,
                             d_out=d_out, temperature=temperature)
    out = jax.block_until_ready(out)
    assert out.shape == (B, d_out)
    assert bool(jnp.all(jnp.isfinite(out)))
    ref = reference_forward(params, x_num, x_cat, cand_num, cand_cat, cand_y,
                            d_out=d_out, temperature=temperature,
                            d_in_total=d_in_total, dim=dim)
    assert bool(jnp.allclose(out, ref, atol=0.2, rtol=0.05))

    # --- Test 2: regression (d_out=1), B > tile -> precomputed-zc path + padding. ---
    B2, N2 = 300, 200
    d_in2, dim2, d_out2, temp2 = 5, 48, 1, 0.7

    kp2, kx2, kc2, ky2, key = jax.random.split(key, 5)
    params2 = init_params(kp2, d_in2, dim2)
    x_num2 = jax.random.normal(kx2, (B2, d_in2), jnp.float32)
    cand_num2 = jax.random.normal(kc2, (N2, d_in2), jnp.float32)
    cand_y2 = jax.random.normal(ky2, (N2,), jnp.float32)

    out2 = modern_nca_forward(params2, x_num2, None, cand_num2, None, cand_y2,
                              d_out=d_out2, temperature=temp2)
    out2 = jax.block_until_ready(out2)
    assert out2.shape == (B2,)
    assert bool(jnp.all(jnp.isfinite(out2)))
    ref2 = reference_forward(params2, x_num2, None, cand_num2, None, cand_y2,
                             d_out=d_out2, temperature=temp2,
                             d_in_total=d_in2, dim=dim2)
    assert bool(jnp.allclose(out2, ref2, atol=0.2, rtol=0.05))

    print("KERNEL_OK")
</pallas_src>

<mosaic_0001>
module attributes {stable_mosaic.version = 11 : i64} {
  func.func @fused_nca_kernel(%arg0: i32, %arg1: i32, %arg2: memref<8x128xbf16, #tpu.memory_space<vmem>>, %arg3: memref<128x128xbf16, #tpu.memory_space<vmem>>, %arg4: memref<128x3xf32, #tpu.memory_space<vmem>>, %arg5: memref<1x128xf32, #tpu.memory_space<vmem>>, %arg6: memref<128x128xbf16, #tpu.memory_space<vmem>>, %arg7: memref<1x128xf32, #tpu.memory_space<vmem>>, %arg8: memref<128x128xbf16, #tpu.memory_space<vmem>>, %arg9: memref<1x128xf32, #tpu.memory_space<vmem>>, %arg10: memref<8x3xf32, #tpu.memory_space<vmem>>, %arg11: memref<8x128xbf16, #tpu.memory_space<vmem>>, %arg12: memref<8x1xf32, #tpu.memory_space<vmem>>, %arg13: memref<8x1xf32, #tpu.memory_space<vmem>>, %arg14: memref<8x1xf32, #tpu.memory_space<vmem>>, %arg15: memref<8x3xf32, #tpu.memory_space<vmem>>) attributes {dimension_semantics = [#tpu.dimension_semantics<parallel>, #tpu.dimension_semantics<arbitrary>], iteration_bounds = array<i64: 1, 1>, scalar_prefetch = 0 : i64, scratch_operands = 5 : i64, tpu.core_type = #tpu.core_type<tc>, window_params = [{transform_indices = @transform_0, window_bounds = array<i64: 8, 128>}, {transform_indices = @transform_1, window_bounds = array<i64: 128, 128>}, {transform_indices = @transform_2, window_bounds = array<i64: 128, 3>}, {transform_indices = @transform_3, window_bounds = array<i64: 1, 128>}, {pipeline_mode = #tpu.pipeline_mode<synchronous>, transform_indices = @transform_4, window_bounds = array<i64: 128, 128>}, {pipeline_mode = #tpu.pipeline_mode<synchronous>, transform_indices = @transform_5, window_bounds = array<i64: 1, 128>}, {pipeline_mode = #tpu.pipeline_mode<synchronous>, transform_indices = @transform_6, window_bounds = array<i64: 128, 128>}, {pipeline_mode = #tpu.pipeline_mode<synchronous>, transform_indices = @transform_7, window_bounds = array<i64: 1, 128>}, {transform_indices = @transform_8, window_bounds = array<i64: 8, 3>}]} {
    %c0_i32 = arith.constant 0 : i32
    %0 = arith.cmpi eq, %arg1, %c0_i32 : i32
    %1 = arith.extui %0 : i1 to i32
    %c0_i32_0 = arith.constant 0 : i32
    %2 = arith.cmpi ne, %1, %c0_i32_0 : i32
    scf.if %2 {
      %c0_43 = arith.constant 0 : index
      %c0_44 = arith.constant 0 : index
      %67 = vector.load %arg2[%c0_43, %c0_44] : memref<8x128xbf16, #tpu.memory_space<vmem>>, vector<8x128xbf16>
      %c0_45 = arith.constant 0 : index
      %c0_46 = arith.constant 0 : index
      %68 = vector.load %arg6[%c0_45, %c0_46] : memref<128x128xbf16, #tpu.memory_space<vmem>>, vector<128x128xbf16>
      %cst_47 = arith.constant dense<0.000000e+00> : vector<8x128xf32>
      %69 = tpu.matmul %67, %68, %cst_47 {dimension_numbers = #tpu.dot_dimension_numbers<[1], [0], [0], [1], [0, 0, 1, 1], [], []>} : vector<8x128xbf16>, vector<128x128xbf16>, vector<8x128xf32> -> vector<8x128xf32>
      %c0_48 = arith.constant 0 : index
      %c0_49 = arith.constant 0 : index
      %70 = vector.load %arg7[%c0_48, %c0_49] : memref<1x128xf32, #tpu.memory_space<vmem>>, vector<1x128xf32>
      %71 = vector.broadcast %70 : vector<1x128xf32> to vector<8x128xf32>
      %72 = arith.addf %69, %71 : vector<8x128xf32>
      %cst_50 = arith.constant 0.000000e+00 : f32
      %73 = vector.broadcast %cst_50 : f32 to vector<8x128xf32>
      %74 = arith.maximumf %72, %73 : vector<8x128xf32>
      %75 = arith.truncf %74 : vector<8x128xf32> to vector<8x128xbf16>
      %c0_51 = arith.constant 0 : index
      %c0_52 = arith.constant 0 : index
      %76 = vector.load %arg8[%c0_51, %c0_52] : memref<128x128xbf16, #tpu.memory_space<vmem>>, vector<128x128xbf16>
      %cst_53 = arith.constant dense<0.000000e+00> : vector<8x128xf32>
      %77 = tpu.matmul %75, %76, %cst_53 {dimension_numbers = #tpu.dot_dimension_numbers<[1], [0], [0], [1], [0, 0, 1, 1], [], []>} : vector<8x128xbf16>, vector<128x128xbf16>, vector<8x128xf32> -> vector<8x128xf32>
      %c0_54 = arith.constant 0 : index
      %c0_55 = arith.constant 0 : index
      %78 = vector.load %arg9[%c0_54, %c0_55] : memref<1x128xf32, #tpu.memory_space<vmem>>, vector<1x128xf32>
      %79 = vector.broadcast %78 : vector<1x128xf32> to vector<8x128xf32>
      %80 = arith.addf %77, %79 : vector<8x128xf32>
      %81 = arith.truncf %80 : vector<8x128xf32> to vector<8x128xbf16>
      %c0_56 = arith.constant 0 : index
      %c0_57 = arith.constant 0 : index
      %82 = vector.load %arg11[%c0_56, %c0_57] : memref<8x128xbf16, #tpu.memory_space<vmem>>, vector<8x128xbf16>
      tpu.vector_store %arg11[%c0_56, %c0_57], %81 {strides = array<i32>} : memref<8x128xbf16, #tpu.memory_space<vmem>>, vector<8x128xbf16>,
      %83 = arith.extf %81 : vector<8x128xbf16> to vector<8x128xf32>
      %84 = arith.mulf %83, %83 : vector<8x128xf32>
      %cst_58 = arith.constant dense<0.000000e+00> : vector<8xf32>
      %85 = vector.multi_reduction <add>, %84, %cst_58 [1] : vector<8x128xf32> to vector<8xf32>
      %86 = vector.shape_cast %85 : vector<8xf32> to vector<8x1xf32>
      %c0_59 = arith.constant 0 : index
      %c0_60 = arith.constant 0 : index
      %87 = vector.load %arg12[%c0_59, %c0_60] : memref<8x1xf32, #tpu.memory_space<vmem>>, vector<8x1xf32>
      tpu.vector_store %arg12[%c0_59, %c0_60], %86 {strides = array<i32>} : memref<8x1xf32, #tpu.memory_space<vmem>>, vector<8x1xf32>,
      %cst_61 = arith.constant 0xFF800000 : f32
      %88 = vector.broadcast %cst_61 : f32 to vector<8x1xf32>
      %c0_62 = arith.constant 0 : index
      %c0_63 = arith.constant 0 : index
      %89 = vector.load %arg13[%c0_62, %c0_63] : memref<8x1xf32, #tpu.memory_space<vmem>>, vector<8x1xf32>
      tpu.vector_store %arg13[%c0_62, %c0_63], %88 {strides = array<i32>} : memref<8x1xf32, #tpu.memory_space<vmem>>, vector<8x1xf32>,
      %cst_64 = arith.constant 0.000000e+00 : f32
      %90 = vector.broadcast %cst_64 : f32 to vector<8x1xf32>
      %c0_65 = arith.constant 0 : index
      %c0_66 = arith.constant 0 : index
      %91 = vector.load %arg14[%c0_65, %c0_66] : memref<8x1xf32, #tpu.memory_space<vmem>>, vector<8x1xf32>
      tpu.vector_store %arg14[%c0_65, %c0_66], %90 {strides = array<i32>} : memref<8x1xf32, #tpu.memory_space<vmem>>, vector<8x1xf32>,
      %cst_67 = arith.constant 0.000000e+00 : f32
      %92 = vector.broadcast %cst_67 : f32 to vector<8x3xf32>
      %c0_68 = arith.constant 0 : index
      %c0_69 = arith.constant 0 : index
      %93 = vector.load %arg15[%c0_68, %c0_69] : memref<8x3xf32, #tpu.memory_space<vmem>>, vector<8x3xf32>
      tpu.vector_store %arg15[%c0_68, %c0_69], %92 {strides = array<i32>} : memref<8x3xf32, #tpu.memory_space<vmem>>, vector<8x3xf32>,
    } else {
    }
    %c0 = arith.constant 0 : index
    %c0_1 = arith.constant 0 : index
    %3 = vector.load %arg3[%c0, %c0_1] : memref<128x128xbf16, #tpu.memory_space<vmem>>, vector<128x128xbf16>
    %c0_2 = arith.constant 0 : index
    %c0_3 = arith.constant 0 : index
    %4 = vector.load %arg6[%c0_2, %c0_3] : memref<128x128xbf16, #tpu.memory_space<vmem>>, vector<128x128xbf16>
    %cst = arith.constant dense<0.000000e+00> : vector<128x128xf32>
    %5 = tpu.matmul %3, %4, %cst {dimension_numbers = #tpu.dot_dimension_numbers<[1], [0], [0], [1], [0, 0, 1, 1], [], []>} : vector<128x128xbf16>, vector<128x128xbf16>, vector<128x128xf32> -> vector<128x128xf32>
    %c0_4 = arith.constant 0 : index
    %c0_5 = arith.constant 0 : index
    %6 = vector.load %arg7[%c0_4, %c0_5] : memref<1x128xf32, #tpu.memory_space<vmem>>, vector<1x128xf32>
    %7 = vector.broadcast %6 : vector<1x128xf32> to vector<128x128xf32>
    %8 = arith.addf %5, %7 : vector<128x128xf32>
    %cst_6 = arith.constant 0.000000e+00 : f32
    %9 = vector.broadcast %cst_6 : f32 to vector<128x128xf32>
    %10 = arith.maximumf %8, %9 : vector<128x128xf32>
    %11 = arith.truncf %10 : vector<128x128xf32> to vector<128x128xbf16>
    %c0_7 = arith.constant 0 : index
    %c0_8 = arith.constant 0 : index
    %12 = vector.load %arg8[%c0_7, %c0_8] : memref<128x128xbf16, #tpu.memory_space<vmem>>, vector<128x128xbf16>
    %cst_9 = arith.constant dense<0.000000e+00> : vector<128x128xf32>
    %13 = tpu.matmul %11, %12, %cst_9 {dimension_numbers = #tpu.dot_dimension_numbers<[1], [0], [0], [1], [0, 0, 1, 1], [], []>} : vector<128x128xbf16>, vector<128x128xbf16>, vector<128x128xf32> -> vector<128x128xf32>
    %c0_10 = arith.constant 0 : index
    %c0_11 = arith.constant 0 : index
    %14 = vector.load %arg9[%c0_10, %c0_11] : memref<1x128xf32, #tpu.memory_space<vmem>>, vector<1x128xf32>
    %15 = vector.broadcast %14 : vector<1x128xf32> to vector<128x128xf32>
    %16 = arith.addf %13, %15 : vector<128x128xf32>
    %17 = arith.truncf %16 : vector<128x128xf32> to vector<128x128xbf16>
    %18 = arith.extf %17 : vector<128x128xbf16> to vector<128x128xf32>
    %19 = arith.mulf %18, %18 : vector<128x128xf32>
    %cst_12 = arith.constant dense<0.000000e+00> : vector<128xf32>
    %20 = vector.multi_reduction <add>, %19, %cst_12 [1] : vector<128x128xf32> to vector<128xf32>
    %21 = vector.shape_cast %20 : vector<128xf32> to vector<1x128xf32>
    %c0_13 = arith.constant 0 : index
    %c0_14 = arith.constant 0 : index
    %22 = vector.load %arg11[%c0_13, %c0_14] : memref<8x128xbf16, #tpu.memory_space<vmem>>, vector<8x128xbf16>
    %cst_15 = arith.constant dense<0.000000e+00> : vector<8x128xf32>
    %23 = tpu.matmul %22, %17, %cst_15 {dimension_numbers = #tpu.dot_dimension_numbers<[1], [1], [0], [0], [0, 0, 1, 0], [], []>} : vector<8x128xbf16>, vector<128x128xbf16>, vector<8x128xf32> -> vector<8x128xf32>
    %c0_16 = arith.constant 0 : index
    %c0_17 = arith.constant 0 : index
    %24 = vector.load %arg12[%c0_16, %c0_17] : memref<8x1xf32, #tpu.memory_space<vmem>>, vector<8x1xf32>
    %25 = vector.broadcast %24 : vector<8x1xf32> to vector<8x128xf32>
    %26 = vector.broadcast %21 : vector<1x128xf32> to vector<8x128xf32>
    %27 = arith.addf %25, %26 : vector<8x128xf32>
    %cst_18 = arith.constant 2.000000e+00 : f32
    %28 = vector.broadcast %cst_18 : f32 to vector<8x128xf32>
    %29 = arith.mulf %28, %23 : vector<8x128xf32>
    %30 = arith.subf %27, %29 : vector<8x128xf32>
    %cst_19 = arith.constant 0.000000e+00 : f32
    %31 = vector.broadcast %cst_19 : f32 to vector<8x128xf32>
    %32 = arith.maximumf %30, %31 : vector<8x128xf32>
    %33 = math.sqrt %32 : vector<8x128xf32>
    %cst_20 = arith.constant 0.000000e+00 : f32
    %34 = vector.broadcast %cst_20 : f32 to vector<8x128xf32>
    %35 = arith.subf %34, %33 : vector<8x128xf32>
    %cst_21 = arith.constant 1.000000e+00 : f32
    %36 = vector.broadcast %cst_21 : f32 to vector<8x128xf32>
    %37 = arith.mulf %35, %36 : vector<8x128xf32>
    %c0_22 = arith.constant 0 : index
    %c0_23 = arith.constant 0 : index
    %38 = vector.load %arg5[%c0_22, %c0_23] : memref<1x128xf32, #tpu.memory_space<vmem>>, vector<1x128xf32>
    %39 = vector.broadcast %38 : vector<1x128xf32> to vector<8x128xf32>
    %40 = arith.addf %37, %39 : vector<8x128xf32>
    %c0_24 = arith.constant 0 : index
    %c0_25 = arith.constant 0 : index
    %41 = vector.load %arg13[%c0_24, %c0_25] : memref<8x1xf32, #tpu.memory_space<vmem>>, vector<8x1xf32>
    %cst_26 = arith.constant dense<0xFF800000> : vector<8xf32>
    %42 = vector.multi_reduction <maximumf>, %40, %cst_26 [1] : vector<8x128xf32> to vector<8xf32>
    %43 = vector.shape_cast %42 : vector<8xf32> to vector<8x1xf32>
    %44 = arith.maximumf %41, %43 : vector<8x1xf32>
    %45 = arith.subf %41, %44 : vector<8x1xf32>
    %46 = math.exp %45 : vector<8x1xf32>
    %47 = vector.broadcast %44 : vector<8x1xf32> to vector<8x128xf32>
    %48 = arith.subf %40, %47 : vector<8x128xf32>
    %49 = math.exp %48 : vector<8x128xf32>
    %c0_27 = arith.constant 0 : index
    %c0_28 = arith.constant 0 : index
    %50 = vector.load %arg14[%c0_27, %c0_28] : memref<8x1xf32, #tpu.memory_space<vmem>>, vector<8x1xf32>
    %51 = arith.mulf %46, %50 : vector<8x1xf32>
    %cst_29 = arith.constant dense<0.000000e+00> : vector<8xf32>
    %52 = vector.multi_reduction <add>, %49, %cst_29 [1] : vector<8x128xf32> to vector<8xf32>
    %53 = vector.shape_cast %52 : vector<8xf32> to vector<8x1xf32>
    %54 = arith.addf %51, %53 : vector<8x1xf32>
    %c0_30 = arith.constant 0 : index
    %c0_31 = arith.constant 0 : index
    %55 = vector.load %arg14[%c0_30, %c0_31] : memref<8x1xf32, #tpu.memory_space<vmem>>, vector<8x1xf32>
    tpu.vector_store %arg14[%c0_30, %c0_31], %54 {strides = array<i32>} : memref<8x1xf32, #tpu.memory_space<vmem>>, vector<8x1xf32>,
    %c0_32 = arith.constant 0 : index
    %c0_33 = arith.constant 0 : index
    %56 = vector.load %arg15[%c0_32, %c0_33] : memref<8x3xf32, #tpu.memory_space<vmem>>, vector<8x3xf32>
    %57 = vector.broadcast %46 : vector<8x1xf32> to vector<8x3xf32>
    %58 = arith.mulf %57, %56 : vector<8x3xf32>
    %c0_34 = arith.constant 0 : index
    %c0_35 = arith.constant 0 : index
    %59 = vector.load %arg4[%c0_34, %c0_35] : memref<128x3xf32, #tpu.memory_space<vmem>>, vector<128x3xf32>
    %cst_36 = arith.constant dense<0.000000e+00> : vector<8x3xf32>
    %60 = tpu.matmul %49, %59, %cst_36 {dimension_numbers = #tpu.dot_dimension_numbers<[1], [0], [0], [1], [0, 0, 1, 1], [], []>} : vector<8x128xf32>, vector<128x3xf32>, vector<8x3xf32> -> vector<8x3xf32>
    %61 = arith.addf %58, %60 : vector<8x3xf32>
    %c0_37 = arith.constant 0 : index
    %c0_38 = arith.constant 0 : index
    %62 = vector.load %arg15[%c0_37, %c0_38] : memref<8x3xf32, #tpu.memory_space<vmem>>, vector<8x3xf32>
    tpu.vector_store %arg15[%c0_37, %c0_38], %61 {strides = array<i32>} : memref<8x3xf32, #tpu.memory_space<vmem>>, vector<8x3xf32>,
    %c0_39 = arith.constant 0 : index
    %c0_40 = arith.constant 0 : index
    %63 = vector.load %arg13[%c0_39, %c0_40] : memref<8x1xf32, #tpu.memory_space<vmem>>, vector<8x1xf32>
    tpu.vector_store %arg13[%c0_39, %c0_40], %44 {strides = array<i32>} : memref<8x1xf32, #tpu.memory_space<vmem>>, vector<8x1xf32>,
    %c0_i32_41 = arith.constant 0 : i32
    %64 = arith.cmpi eq, %arg1, %c0_i32_41 : i32
    %65 = arith.extui %64 : i1 to i32
    %c0_i32_42 = arith.constant 0 : i32
    %66 = arith.cmpi ne, %65, %c0_i32_42 : i32
    scf.if %66 {
      %c0_43 = arith.constant 0 : index
      %c0_44 = arith.constant 0 : index
      %67 = vector.load %arg15[%c0_43, %c0_44] : memref<8x3xf32, #tpu.memory_space<vmem>>, vector<8x3xf32>
      %c0_45 = arith.constant 0 : index
      %c0_46 = arith.constant 0 : index
      %68 = vector.load %arg14[%c0_45, %c0_46] : memref<8x1xf32, #tpu.memory_space<vmem>>, vector<8x1xf32>
      %69 = vector.broadcast %68 : vector<8x1xf32> to vector<8x3xf32>
      %70 = arith.divf %67, %69 : vector<8x3xf32>
      %cst_47 = arith.constant 1.000000e-07 : f32
      %71 = vector.broadcast %cst_47 : f32 to vector<8x3xf32>
      %72 = arith.addf %70, %71 : vector<8x3xf32>
      %73 = math.log %72 : vector<8x3xf32>
      %c0_48 = arith.constant 0 : index
      %c0_49 = arith.constant 0 : index
      %74 = vector.load %arg10[%c0_48, %c0_49] : memref<8x3xf32, #tpu.memory_space<vmem>>, vector<8x3xf32>
      tpu.vector_store %arg10[%c0_48, %c0_49], %73 {strides = array<i32>} : memref<8x3xf32, #tpu.memory_space<vmem>>, vector<8x3xf32>,
    } else {
    }
    return
  }
  func.func @transform_0(%arg0: i32, %arg1: i32) -> (i32, i32) {
    %c0_i32 = arith.constant 0 : i32
    %c0_i32_0 = arith.constant 0 : i32
    return %arg0, %c0_i32 : i32, i32
  }
  func.func @transform_1(%arg0: i32, %arg1: i32) -> (i32, i32) {
    %c0_i32 = arith.constant 0 : i32
    %c0_i32_0 = arith.constant 0 : i32
    return %arg1, %c0_i32 : i32, i32
  }
  func.func @transform_2(%arg0: i32, %arg1: i32) -> (i32, i32) {
    %c0_i32 = arith.constant 0 : i32
    %c0_i32_0 = arith.constant 0 : i32
    return %arg1, %c0_i32 : i32, i32
  }
  func.func @transform_3(%arg0: i32, %arg1: i32) -> (i32, i32) {
    %c0_i32 = arith.constant 0 : i32
    %c0_i32_0 = arith.constant 0 : i32
    return %c0_i32, %arg1 : i32, i32
  }
  func.func @transform_4(%arg0: i32, %arg1: i32) -> (i32, i32) {
    %c0_i32 = arith.constant 0 : i32
    %c0_i32_0 = arith.constant 0 : i32
    %c0_i32_1 = arith.constant 0 : i32
    return %c0_i32, %c0_i32_0 : i32, i32
  }
  func.func @transform_5(%arg0: i32, %arg1: i32) -> (i32, i32) {
    %c0_i32 = arith.constant 0 : i32
    %c0_i32_0 = arith.constant 0 : i32
    %c0_i32_1 = arith.constant 0 : i32
    return %c0_i32, %c0_i32_0 : i32, i32
  }
  func.func @transform_6(%arg0: i32, %arg1: i32) -> (i32, i32) {
    %c0_i32 = arith.constant 0 : i32
    %c0_i32_0 = arith.constant 0 : i32
    %c0_i32_1 = arith.constant 0 : i32
    return %c0_i32, %c0_i32_0 : i32, i32
  }
  func.func @transform_7(%arg0: i32, %arg1: i32) -> (i32, i32) {
    %c0_i32 = arith.constant 0 : i32
    %c0_i32_0 = arith.constant 0 : i32
    %c0_i32_1 = arith.constant 0 : i32
    return %c0_i32, %c0_i32_0 : i32, i32
  }
  func.func @transform_8(%arg0: i32, %arg1: i32) -> (i32, i32) {
    %c0_i32 = arith.constant 0 : i32
    %c0_i32_0 = arith.constant 0 : i32
    return %arg0, %c0_i32 : i32, i32
  }
}

</mosaic_0001>

<llo_original>
// kernel: tpu_custom_call.1
$region0: #{tpu_custom_call.1}
  #allocation0 [shape = 'u32[]', space=smem, size = 0x4, offset = 0x4, fixed_abs, tag = 'smem constant byte address 0x4 - core index']
  #allocation1 [shape = 'u32[144,128]{1,0:T(1,128)}', space=vmem, size = 0x12000, scoped, tag = 'internal scratch']
  #allocation2 [shape = 'bf16[8,128]{1,0:T(8,128)(2,1)}', space=vmem, size = 0x800, scoped, tag = 'scratch operand']
  #allocation3 [shape = 'f32[8,1]{1,0:T(8,128)}', space=vmem, size = 0x1000, scoped, tag = 'scratch operand']
  #allocation4 [shape = 'f32[8,1]{1,0:T(8,128)}', space=vmem, size = 0x1000, scoped, tag = 'scratch operand']
  #allocation5 [shape = 'f32[8,1]{1,0:T(8,128)}', space=vmem, size = 0x1000, scoped, tag = 'scratch operand']
  #allocation6 [shape = 'f32[8,3]{1,0:T(8,128)}', space=vmem, size = 0x1000, scoped, tag = 'scratch operand']
  %s0 = inlined_call_operand.vmem [shape: bf16[8,128], index: 0, kind: input, shape index: {}]
  %s1 = inlined_call_operand.vmem [shape: bf16[128,128], index: 1, kind: input, shape index: {}]
  %s2 = inlined_call_operand.vmem [shape: f32[128,3], index: 2, kind: input, shape index: {}]
  %s3 = inlined_call_operand.vmem [shape: f32[1,128], index: 3, kind: input, shape index: {}]
  %s4 = inlined_call_operand.vmem [shape: bf16[128,128], index: 4, kind: input, shape index: {}]
  %s5 = inlined_call_operand.vmem [shape: f32[1,128], index: 5, kind: input, shape index: {}]
  %s6 = inlined_call_operand.hbm [shape: bf16[128,128], index: 6, kind: input, shape index: {}]
  %s7 = inlined_call_operand.vmem [shape: f32[1,128], index: 7, kind: input, shape index: {}]
  %s8 = inlined_call_operand.vmem [shape: f32[8,3], index: 8, kind: output, shape index: {}]
  %s9 = sld [smem:[#allocation0]]
  $region54: #{tpu_custom_call.1} parent=0
    _
  %s11 = ssub.s32 1, %s9
  %s12 = scalar_select 0, %s11, %s9
  $region1: #{tpu_custom_call.1} parent=0
    #allocation7 [shape = 'u8[32768]{0}', space=vmem, size = 0x8000, scoped, tag = 'input window, operand 6, single buffered']
    #allocation8 [shape = 's32[1]{0}', space=sflag, size = 0x4, scoped, tag = 'scoped memory for tpu_custom_call.1']
    %13 = vsyncpa [#allocation8], 0
    // Predicated region
    $region2: #{tpu_custom_call.1} parent=1 // pred_check
      _
    $region3: #{tpu_custom_call.1} parent=1 // pred_check_branch
      %15 = sbr.rel (0) target = $region5
    $region4: #{tpu_custom_call.1} parent=1 // pred_region
      _
    $region5: #{tpu_custom_call.1} parent=1 // pred_fallthru
      _
    // Predicated region
    $region6: #{tpu_custom_call.1} parent=1 // pred_check
      _
    $region7: #{tpu_custom_call.1} parent=1 // pred_check_branch
      %17 = sbr.rel (0) target = $region9
    $region8: #{tpu_custom_call.1} parent=1 // pred_region
      _
    $region9: #{tpu_custom_call.1} parent=1 // pred_fallthru
      _
    // Predicated region
    $region10: #{tpu_custom_call.1} parent=1 // pred_check
      _
    $region11: #{tpu_custom_call.1} parent=1 // pred_check_branch
      %19 = sbr.rel (0) target = $region13
    $region12: #{tpu_custom_call.1} parent=1 // pred_region
      _
    $region13: #{tpu_custom_call.1} parent=1 // pred_fallthru
      _
    // Predicated region
    $region14: #{tpu_custom_call.1} parent=1 // pred_check
      _
    $region15: #{tpu_custom_call.1} parent=1 // pred_check_branch
      %21 = sbr.rel (0) target = $region17
    $region16: #{tpu_custom_call.1} parent=1 // pred_region
      _
    $region17: #{tpu_custom_call.1} parent=1 // pred_fallthru
      _
    // Predicated region
    $region18: #{tpu_custom_call.1} parent=1 // pred_check
      _
    $region19: #{tpu_custom_call.1} parent=1 // pred_check_branch
      %23 = sbr.rel (0) target = $region21
    $region20: #{tpu_custom_call.1} parent=1 // pred_region
      _
    $region21: #{tpu_custom_call.1} parent=1 // pred_fallthru
      _
    // Predicated region
    $region22: #{tpu_custom_call.1} parent=1 // pred_check
      _
    $region23: #{tpu_custom_call.1} parent=1 // pred_check_branch
      %25 = sbr.rel (0) target = $region25
    $region24: #{tpu_custom_call.1} parent=1 // pred_region
      _
    $region25: #{tpu_custom_call.1} parent=1 // pred_fallthru
      _
    // Predicated region
    $region26: #{tpu_custom_call.1} parent=1 // pred_check
      _
    $region27: #{tpu_custom_call.1} parent=1 // pred_check_branch
      %27 = sbr.rel (0) target = $region29
    $region28: #{tpu_custom_call.1} parent=1 // pred_region
      %s29 = ssub.s32 1024, 1024
      %30 = vsyncadd [#allocation8], %s29
      %s31 = sshll.u32 [#allocation7], 4
      %s32 = int_to_ptr.vmem [resolvable:$true] %s31
      %37 = dma.hbm_to_vmem [thread:$0]  %s6, 1024, %s32, [#allocation8], 64, 64, 4
    $region29: #{tpu_custom_call.1} parent=1 // pred_fallthru
      _
    // Predicated region
    $region30: #{tpu_custom_call.1} parent=1 // pred_check
      _
    $region31: #{tpu_custom_call.1} parent=1 // pred_check_branch
      %39 = sbr.rel (0) target = $region33
    $region32: #{tpu_custom_call.1} parent=1 // pred_region
      _
    $region33: #{tpu_custom_call.1} parent=1 // pred_fallthru
      _
    // Predicated region
    $region34: #{tpu_custom_call.1} parent=1 // pred_check
      _
    $region35: #{tpu_custom_call.1} parent=1 // pred_check_branch
      %41 = sbr.rel (0) target = $region37
    $region36: #{tpu_custom_call.1} parent=1 // pred_region
      %42 = dma.done [#allocation8], 1024
    $region37: #{tpu_custom_call.1} parent=1 // pred_fallthru
      _
    %p44 = scmp.eq.s32.totalorder 0, 0
    // Predicated region
    $region38: #{tpu_custom_call.1} parent=1 // pred_check
      %p45 = pneg %p44
    $region39: #{tpu_custom_call.1} parent=1 // pred_check_branch
      %47 = sbr.rel (%p45) target = $region41
    $region40: #{tpu_custom_call.1} parent=1 // pred_region
      %v48 = vld [vmem:[%s0] sm:$0xf]
      %v49 = vld [vmem:[%s4] sm:$0xf]
      %v50 = vld [vmem:[%s4 + $0x4] sm:$0xf]
      %v51 = vld [vmem:[%s4 + $0x8] sm:$0xf]
      %v52 = vld [vmem:[%s4 + $0xc] sm:$0xf]
      %v53 = vld [vmem:[%s4 + $0x10] sm:$0xf]
      %v54 = vld [vmem:[%s4 + $0x14] sm:$0xf]
      %v55 = vld [vmem:[%s4 + $0x18] sm:$0xf]
      %v56 = vld [vmem:[%s4 + $0x1c] sm:$0xf]
      %v57 = vld [vmem:[%s4 + $0x20] sm:$0xf]
      %v58 = vld [vmem:[%s4 + $0x24] sm:$0xf]
      %v59 = vld [vmem:[%s4 + $0x28] sm:$0xf]
      %v60 = vld [vmem:[%s4 + $0x2c] sm:$0xf]
      %v61 = vld [vmem:[%s4 + $0x30] sm:$0xf]
      %v62 = vld [vmem:[%s4 + $0x34] sm:$0xf]
      %v63 = vld [vmem:[%s4 + $0x38] sm:$0xf]
      %v64 = vld [vmem:[%s4 + $0x3c] sm:$0xf]
      %v65 = vld [vmem:[%s5] sm:$0x1]
      %v67 = vlaneseq
      %v68 = vshrl.u32 %v67, 7
      %v69 = vsub.s32 0, %v68
      %v70 = vrot.slane %v65, %v69
      %v88 = vunpack.c.l.b16 %v49
      %v89 = vunpack.c.l.b16 %v50
      %v90 = vunpack.c.l.b16 %v51
      %v91 = vunpack.c.l.b16 %v52
      %v92 = vunpack.c.l.b16 %v53
      %v93 = vunpack.c.l.b16 %v54
      %v94 = vunpack.c.l.b16 %v55
      %v95 = vunpack.c.l.b16 %v56
      %v96 = vunpack.c.l.b16 %v57
      %v97 = vunpack.c.l.b16 %v58
      %v98 = vunpack.c.l.b16 %v59
      %v99 = vunpack.c.l.b16 %v60
      %v100 = vunpack.c.l.b16 %v61
      %v101 = vunpack.c.l.b16 %v62
      %v102 = vunpack.c.l.b16 %v63
      %v103 = vunpack.c.l.b16 %v64
      %v104 = vpack.c.b16 %v89, %v88
      %v105 = vpack.c.b16 %v91, %v90
      %v106 = vpack.c.b16 %v93, %v92
      %v107 = vpack.c.b16 %v95, %v94
      %v108 = vpack.c.b16 %v97, %v96
      %v109 = vpack.c.b16 %v99, %v98
      %v110 = vpack.c.b16 %v101, %v100
      %v111 = vpack.c.b16 %v103, %v102
      %120 = vmatprep.subr.bf16.mxu0 0
      %121 = vmatpush1.bf16.msra.mxu0 %v104
      %122 = vmatprep.subr.bf16.mxu0 0
      %123 = vmatpush1.bf16.msra.mxu0 %v105
      %124 = vmatprep.subr.bf16.mxu0 0
      %125 = vmatpush1.bf16.msra.mxu0 %v106
      %126 = vmatprep.subr.bf16.mxu0 0
      %127 = vmatpush1.bf16.msra.mxu0 %v107
      %128 = vmatprep.subr.bf16.mxu0 0
      %129 = vmatpush1.bf16.msra.mxu0 %v108
      %130 = vmatprep.subr.bf16.mxu0 0
      %131 = vmatpush1.bf16.msra.mxu0 %v109
      %132 = vmatprep.subr.bf16.mxu0 0
      %133 = vmatpush1.bf16.msra.mxu0 %v110
      %134 = vmatprep.subr.bf16.mxu0 0
      %135 = vmatpush1.bf16.msra.mxu0 %v111
      %136 = vmatprep.subr.bf16.mxu0 0
      %137 = vmatpush1.bf16.msra.mxu0 0
      %138 = vmatprep.subr.bf16.mxu0 0
      %139 = vmatpush1.bf16.msra.mxu0 0
      %140 = vmatprep.subr.bf16.mxu0 0
      %141 = vmatpush1.bf16.msra.mxu0 0
      %142 = vmatprep.subr.bf16.mxu0 0
      %143 = vmatpush1.bf16.msra.mxu0 0
      %144 = vmatprep.subr.bf16.mxu0 0
      %145 = vmatpush1.bf16.msra.mxu0 0
      %146 = vmatprep.subr.bf16.mxu0 0
      %147 = vmatpush1.bf16.msra.mxu0 0
      %148 = vmatprep.subr.bf16.mxu0 0
      %149 = vmatpush1.bf16.msra.mxu0 0
      %150 = vmatprep.subr.bf16.mxu0 0
      %151 = vmatpush1.bf16.msra.mxu0 0
      %152 = vmatprep.mubr.bf16.mxu0 0
      %153 = vmatmul.mubr.bf16.gmra.mrb[0].mxu0 %v48
      %v154 = vpop.f32.mrb[0].mxu0
      %v155 = vadd.f32 %v70, %v154
      %v156 = vpop.f32.mrb[0].mxu0
      %v157 = vpop.f32.mrb[0].mxu0
      %v158 = vpop.f32.mrb[0].mxu0
      %159 = vdwg.mxu0
      %v160 = vmax.f32 %v155, 0.0
      %v161 = vpack.c.bf16 %v160, %v160
      %v162 = vld [vmem:[#allocation7] sm:$0xf]
      %v163 = vld [vmem:[#allocation7 + $0x4] sm:$0xf]
      %v164 = vld [vmem:[#allocation7 + $0x8] sm:$0xf]
      %v165 = vld [vmem:[#allocation7 + $0xc] sm:$0xf]
      %v166 = vld [vmem:[#allocation7 + $0x10] sm:$0xf]
      %v167 = vld [vmem:[#allocation7 + $0x14] sm:$0xf]
      %v168 = vld [vmem:[#allocation7 + $0x18] sm:$0xf]
      %v169 = vld [vmem:[#allocation7 + $0x1c] sm:$0xf]
      %v170 = vld [vmem:[#allocation7 + $0x20] sm:$0xf]
      %v171 = vld [vmem:[#allocation7 + $0x24] sm:$0xf]
      %v172 = vld [vmem:[#allocation7 + $0x28] sm:$0xf]
      %v173 = vld [vmem:[#allocation7 + $0x2c] sm:$0xf]
      %v174 = vld [vmem:[#allocation7 + $0x30] sm:$0xf]
      %v175 = vld [vmem:[#allocation7 + $0x34] sm:$0xf]
      %v176 = vld [vmem:[#allocation7 + $0x38] sm:$0xf]
      %v177 = vld [vmem:[#allocation7 + $0x3c] sm:$0xf]
      %v178 = vld [vmem:[%s7] sm:$0x1]
      %v180 = vlaneseq
      %v181 = vshrl.u32 %v180, 7
      %v182 = vsub.s32 0, %v181
      %v183 = vrot.slane %v178, %v182
      %v201 = vunpack.c.l.b16 %v162
      %v202 = vunpack.c.l.b16 %v163
      %v203 = vunpack.c.l.b16 %v164
      %v204 = vunpack.c.l.b16 %v165
      %v205 = vunpack.c.l.b16 %v166
      %v206 = vunpack.c.l.b16 %v167
      %v207 = vunpack.c.l.b16 %v168
      %v208 = vunpack.c.l.b16 %v169
      %v209 = vunpack.c.l.b16 %v170
      %v210 = vunpack.c.l.b16 %v171
      %v211 = vunpack.c.l.b16 %v172
      %v212 = vunpack.c.l.b16 %v173
      %v213 = vunpack.c.l.b16 %v174
      %v214 = vunpack.c.l.b16 %v175
      %v215 = vunpack.c.l.b16 %v176
      %v216 = vunpack.c.l.b16 %v177
      %v217 = vpack.c.b16 %v202, %v201
      %v218 = vpack.c.b16 %v204, %v203
      %v219 = vpack.c.b16 %v206, %v205
      %v220 = vpack.c.b16 %v208, %v207
      %v221 = vpack.c.b16 %v210, %v209
      %v222 = vpack.c.b16 %v212, %v211
      %v223 = vpack.c.b16 %v214, %v213
      %v224 = vpack.c.b16 %v216, %v215
      %233 = vmatprep.subr.bf16.mxu0 0
      %234 = vmatpush1.bf16.msra.mxu0 %v217
      %235 = vmatprep.subr.bf16.mxu0 0
      %236 = vmatpush1.bf16.msra.mxu0 %v218
      %237 = vmatprep.subr.bf16.mxu0 0
      %238 = vmatpush1.bf16.msra.mxu0 %v219
      %239 = vmatprep.subr.bf16.mxu0 0
      %240 = vmatpush1.bf16.msra.mxu0 %v220
      %241 = vmatprep.subr.bf16.mxu0 0
      %242 = vmatpush1.bf16.msra.mxu0 %v221
      %243 = vmatprep.subr.bf16.mxu0 0
      %244 = vmatpush1.bf16.msra.mxu0 %v222
      %245 = vmatprep.subr.bf16.mxu0 0
      %246 = vmatpush1.bf16.msra.mxu0 %v223
      %247 = vmatprep.subr.bf16.mxu0 0
      %248 = vmatpush1.bf16.msra.mxu0 %v224
      %249 = vmatprep.subr.bf16.mxu0 0
      %250 = vmatpush1.bf16.msra.mxu0 0
      %251 = vmatprep.subr.bf16.mxu0 0
      %252 = vmatpush1.bf16.msra.mxu0 0
      %253 = vmatprep.subr.bf16.mxu0 0
      %254 = vmatpush1.bf16.msra.mxu0 0
      %255 = vmatprep.subr.bf16.mxu0 0
      %256 = vmatpush1.bf16.msra.mxu0 0
      %257 = vmatprep.subr.bf16.mxu0 0
      %258 = vmatpush1.bf16.msra.mxu0 0
      %259 = vmatprep.subr.bf16.mxu0 0
      %260 = vmatpush1.bf16.msra.mxu0 0
      %261 = vmatprep.subr.bf16.mxu0 0
      %262 = vmatpush1.bf16.msra.mxu0 0
      %263 = vmatprep.subr.bf16.mxu0 0
      %264 = vmatpush1.bf16.msra.mxu0 0
      %265 = vmatprep.mubr.bf16.mxu0 0
      %266 = vmatmul.mubr.bf16.gmra.mrb[0].mxu0 %v161
      %v267 = vpop.f32.mrb[0].mxu0
      %v268 = vadd.f32 %v183, %v267
      %v269 = vpop.f32.mrb[0].mxu0
      %v270 = vpop.f32.mrb[0].mxu0
      %v271 = vpop.f32.mrb[0].mxu0
      %272 = vdwg.mxu0
      %v273 = vpack.c.bf16 %v268, %v268
      %274 = vst [vmem:[#allocation2] sm:$0xf] %v273
      %v275 = vunpack.c.l.bf16 %v273
      %v276 = vmul.f32 %v275, %v275
      %277 = vadd.xlane.f32.xlu0 %v276
      %v278 = vpop.xlane.xlu0 %277
      %vm279 = vcmask 7168
      %280 = vst.msk [vmem:[#allocation3] sm:$0xff] %vm279, %v278
      %281 = vst.msk [vmem:[#allocation4] sm:$0xff] %vm279, -inf
      %282 = vst.msk [vmem:[#allocation5] sm:$0xff] %vm279, 0.0
      %vm283 = vcmask 23552
      %284 = vst.msk [vmem:[#allocation6] sm:$0xff] %vm283, 0.0
    $region41: #{tpu_custom_call.1} parent=1 // pred_fallthru
      _
    %v285 = vld [vmem:[%s1] sm:$0xf]
    %v286 = vld [vmem:[%s1 + $0x4] sm:$0xf]
    %v287 = vld [vmem:[%s1 + $0x8] sm:$0xf]
    %v288 = vld [vmem:[%s1 + $0xc] sm:$0xf]
    %v289 = vld [vmem:[%s1 + $0x10] sm:$0xf]
    %v290 = vld [vmem:[%s1 + $0x14] sm:$0xf]
    %v291 = vld [vmem:[%s1 + $0x18] sm:$0xf]
    %v292 = vld [vmem:[%s1 + $0x1c] sm:$0xf]
    %v293 = vld [vmem:[%s1 + $0x20] sm:$0xf]
    %v294 = vld [vmem:[%s1 + $0x24] sm:$0xf]
    %v295 = vld [vmem:[%s1 + $0x28] sm:$0xf]
    %v296 = vld [vmem:[%s1 + $0x2c] sm:$0xf]
    %v297 = vld [vmem:[%s1 + $0x30] sm:$0xf]
    %v298 = vld [vmem:[%s1 + $0x34] sm:$0xf]
    %v299 = vld [vmem:[%s1 + $0x38] sm:$0xf]
    %v300 = vld [vmem:[%s1 + $0x3c] sm:$0xf]
    %v301 = vld [vmem:[%s4] sm:$0xf]
    %v302 = vld [vmem:[%s4 + $0x4] sm:$0xf]
    %v303 = vld [vmem:[%s4 + $0x8] sm:$0xf]
    %v304 = vld [vmem:[%s4 + $0xc] sm:$0xf]
    %v305 = vld [vmem:[%s4 + $0x10] sm:$0xf]
    %v306 = vld [vmem:[%s4 + $0x14] sm:$0xf]
    %v307 = vld [vmem:[%s4 + $0x18] sm:$0xf]
    %v308 = vld [vmem:[%s4 + $0x1c] sm:$0xf]
    %v309 = vld [vmem:[%s4 + $0x20] sm:$0xf]
    %v310 = vld [vmem:[%s4 + $0x24] sm:$0xf]
    %v311 = vld [vmem:[%s4 + $0x28] sm:$0xf]
    %v312 = vld [vmem:[%s4 + $0x2c] sm:$0xf]
    %v313 = vld [vmem:[%s4 + $0x30] sm:$0xf]
    %v314 = vld [vmem:[%s4 + $0x34] sm:$0xf]
    %v315 = vld [vmem:[%s4 + $0x38] sm:$0xf]
    %v316 = vld [vmem:[%s4 + $0x3c] sm:$0xf]
    %v317 = vld [vmem:[%s5] sm:$0x1]
    %v319 = vlaneseq
    %v320 = vshrl.u32 %v319, 7
    %v321 = vsub.s32 0, %v320
    %v322 = vrot.slane %v317, %v321
    %v340 = vunpack.c.l.b16 %v285
    %v341 = vunpack.c.l.b16 %v286
    %v342 = vunpack.c.l.b16 %v287
    %v343 = vunpack.c.l.b16 %v288
    %v344 = vunpack.c.l.b16 %v289
    %v345 = vunpack.c.l.b16 %v290
    %v346 = vunpack.c.l.b16 %v291
    %v347 = vunpack.c.l.b16 %v292
    %v348 = vunpack.c.l.b16 %v293
    %v349 = vunpack.c.l.b16 %v294
    %v350 = vunpack.c.l.b16 %v295
    %v351 = vunpack.c.l.b16 %v296
    %v352 = vunpack.c.l.b16 %v297
    %v353 = vunpack.c.l.b16 %v298
    %v354 = vunpack.c.l.b16 %v299
    %v355 = vunpack.c.l.b16 %v300
    %v356 = vpack.c.b16 %v341, %v340
    %v357 = vpack.c.b16 %v343, %v342
    %v358 = vpack.c.b16 %v345, %v344
    %v359 = vpack.c.b16 %v347, %v346
    %v360 = vpack.c.b16 %v349, %v348
    %v361 = vpack.c.b16 %v351, %v350
    %v362 = vpack.c.b16 %v353, %v352
    %v363 = vpack.c.b16 %v355, %v354
    %v388 = vunpack.c.l.b16 %v301
    %v389 = vunpack.c.l.b16 %v302
    %v390 = vunpack.c.l.b16 %v303
    %v391 = vunpack.c.l.b16 %v304
    %v392 = vunpack.c.l.b16 %v305
    %v393 = vunpack.c.l.b16 %v306
    %v394 = vunpack.c.l.b16 %v307
    %v395 = vunpack.c.l.b16 %v308
    %v396 = vunpack.c.l.b16 %v309
    %v397 = vunpack.c.l.b16 %v310
    %v398 = vunpack.c.l.b16 %v311
    %v399 = vunpack.c.l.b16 %v312
    %v400 = vunpack.c.l.b16 %v313
    %v401 = vunpack.c.l.b16 %v314
    %v402 = vunpack.c.l.b16 %v315
    %v403 = vunpack.c.l.b16 %v316
    %v404 = vpack.c.b16 %v389, %v388
    %v405 = vpack.c.b16 %v391, %v390
    %v406 = vpack.c.b16 %v393, %v392
    %v407 = vpack.c.b16 %v395, %v394
    %v408 = vpack.c.b16 %v397, %v396
    %v409 = vpack.c.b16 %v399, %v398
    %v410 = vpack.c.b16 %v401, %v400
    %v411 = vpack.c.b16 %v403, %v402
    %420 = vmatprep.subr.bf16.mxu0 0
    %421 = vmatpush1.bf16.msra.mxu0 %v404
    %422 = vmatprep.subr.bf16.mxu0 0
    %423 = vmatpush1.bf16.msra.mxu0 %v405
    %424 = vmatprep.subr.bf16.mxu0 0
    %425 = vmatpush1.bf16.msra.mxu0 %v406
    %426 = vmatprep.subr.bf16.mxu0 0
    %427 = vmatpush1.bf16.msra.mxu0 %v407
    %428 = vmatprep.subr.bf16.mxu0 0
    %429 = vmatpush1.bf16.msra.mxu0 %v408
    %430 = vmatprep.subr.bf16.mxu0 0
    %431 = vmatpush1.bf16.msra.mxu0 %v409
    %432 = vmatprep.subr.bf16.mxu0 0
    %433 = vmatpush1.bf16.msra.mxu0 %v410
    %434 = vmatprep.subr.bf16.mxu0 0
    %435 = vmatpush1.bf16.msra.mxu0 %v411
    %436 = vmatprep.subr.bf16.mxu0 0
    %437 = vmatpush1.bf16.msra.mxu0 0
    %438 = vmatprep.subr.bf16.mxu0 0
    %439 = vmatpush1.bf16.msra.mxu0 0
    %440 = vmatprep.subr.bf16.mxu0 0
    %441 = vmatpush1.bf16.msra.mxu0 0
    %442 = vmatprep.subr.bf16.mxu0 0
    %443 = vmatpush1.bf16.msra.mxu0 0
    %444 = vmatprep.subr.bf16.mxu0 0
    %445 = vmatpush1.bf16.msra.mxu0 0
    %446 = vmatprep.subr.bf16.mxu0 0
    %447 = vmatpush1.bf16.msra.mxu0 0
    %448 = vmatprep.subr.bf16.mxu0 0
    %449 = vmatpush1.bf16.msra.mxu0 0
    %450 = vmatprep.subr.bf16.mxu0 0
    %451 = vmatpush1.bf16.msra.mxu0 0
    %452 = vmatprep.mubr.bf16.mxu0 0
    %453 = vmatmul.mubr.bf16.gmra.mrb[0].mxu0 %v356
    %v454 = vpop.f32.mrb[0].mxu0
    %v455 = vadd.f32 %v322, %v454
    %v456 = vpop.f32.mrb[0].mxu0
    %v457 = vpop.f32.mrb[0].mxu0
    %v458 = vadd.f32 %v322, %v457
    %v459 = vpop.f32.mrb[0].mxu0
    %460 = vmatprep.mubr.bf16.mxu0 0
    %461 = vmatmul.mubr.bf16.gmra.mrb[0].mxu0 %v357
    %v462 = vpop.f32.mrb[0].mxu0
    %v463 = vadd.f32 %v322, %v462
    %v464 = vpop.f32.mrb[0].mxu0
    %v465 = vpop.f32.mrb[0].mxu0
    %v466 = vadd.f32 %v322, %v465
    %v467 = vpop.f32.mrb[0].mxu0
    %468 = vmatprep.mubr.bf16.mxu0 0
    %469 = vmatmul.mubr.bf16.gmra.mrb[0].mxu0 %v358
    %v470 = vpop.f32.mrb[0].mxu0
    %v471 = vadd.f32 %v322, %v470
    %v472 = vpop.f32.mrb[0].mxu0
    %v473 = vpop.f32.mrb[0].mxu0
    %v474 = vadd.f32 %v322, %v473
    %v475 = vpop.f32.mrb[0].mxu0
    %476 = vmatprep.mubr.bf16.mxu0 0
    %477 = vmatmul.mubr.bf16.gmra.mrb[0].mxu0 %v359
    %v478 = vpop.f32.mrb[0].mxu0
    %v479 = vadd.f32 %v322, %v478
    %v480 = vpop.f32.mrb[0].mxu0
    %v481 = vpop.f32.mrb[0].mxu0
    %v482 = vadd.f32 %v322, %v481
    %v483 = vpop.f32.mrb[0].mxu0
    %484 = vmatprep.mubr.bf16.mxu0 0
    %485 = vmatmul.mubr.bf16.gmra.mrb[0].mxu0 %v360
    %v486 = vpop.f32.mrb[0].mxu0
    %v487 = vadd.f32 %v322, %v486
    %v488 = vpop.f32.mrb[0].mxu0
    %v489 = vpop.f32.mrb[0].mxu0
    %v490 = vadd.f32 %v322, %v489
    %v491 = vpop.f32.mrb[0].mxu0
    %492 = vmatprep.mubr.bf16.mxu0 0
    %493 = vmatmul.mubr.bf16.gmra.mrb[0].mxu0 %v361
    %v494 = vpop.f32.mrb[0].mxu0
    %v495 = vadd.f32 %v322, %v494
    %v496 = vpop.f32.mrb[0].mxu0
    %v497 = vpop.f32.mrb[0].mxu0
    %v498 = vadd.f32 %v322, %v497
    %v499 = vpop.f32.mrb[0].mxu0
    %500 = vmatprep.mubr.bf16.mxu0 0
    %501 = vmatmul.mubr.bf16.gmra.mrb[0].mxu0 %v362
    %v502 = vpop.f32.mrb[0].mxu0
    %v503 = vadd.f32 %v322, %v502
    %v504 = vpop.f32.mrb[0].mxu0
    %v505 = vpop.f32.mrb[0].mxu0
    %v506 = vadd.f32 %v322, %v505
    %v507 = vpop.f32.mrb[0].mxu0
    %508 = vmatprep.mubr.bf16.mxu0 0
    %509 = vmatmul.mubr.bf16.gmra.mrb[0].mxu0 %v363
    %v510 = vpop.f32.mrb[0].mxu0
    %v511 = vadd.f32 %v322, %v510
    %v512 = vpop.f32.mrb[0].mxu0
    %v513 = vpop.f32.mrb[0].mxu0
    %v514 = vadd.f32 %v322, %v513
    %v515 = vpop.f32.mrb[0].mxu0
    %516 = vdwg.mxu0
    %v517 = vmax.f32 %v455, 0.0
    %v518 = vmax.f32 %v458, 0.0
    %v519 = vmax.f32 %v463, 0.0
    %v520 = vmax.f32 %v466, 0.0
    %v521 = vmax.f32 %v471, 0.0
    %v522 = vmax.f32 %v474, 0.0
    %v523 = vmax.f32 %v479, 0.0
    %v524 = vmax.f32 %v482, 0.0
    %v525 = vmax.f32 %v487, 0.0
    %v526 = vmax.f32 %v490, 0.0
    %v527 = vmax.f32 %v495, 0.0
    %v528 = vmax.f32 %v498, 0.0
    %v529 = vmax.f32 %v503, 0.0
    %v530 = vmax.f32 %v506, 0.0
    %v531 = vmax.f32 %v511, 0.0
    %v532 = vmax.f32 %v514, 0.0
    %v533 = vpack.c.bf16 %v518, %v517
    %v534 = vpack.c.bf16 %v520, %v519
    %v535 = vpack.c.bf16 %v522, %v521
    %v536 = vpack.c.bf16 %v524, %v523
    %v537 = vpack.c.bf16 %v526, %v525
    %v538 = vpack.c.bf16 %v528, %v527
    %v539 = vpack.c.bf16 %v530, %v529
    %v540 = vpack.c.bf16 %v532, %v531
    %v541 = vld [vmem:[#allocation7] sm:$0xf]
    %v542 = vld [vmem:[#allocation7 + $0x4] sm:$0xf]
    %v543 = vld [vmem:[#allocation7 + $0x8] sm:$0xf]
    %v544 = vld [vmem:[#allocation7 + $0xc] sm:$0xf]
    %v545 = vld [vmem:[#allocation7 + $0x10] sm:$0xf]
    %v546 = vld [vmem:[#allocation7 + $0x14] sm:$0xf]
    %v547 = vld [vmem:[#allocation7 + $0x18] sm:$0xf]
    %v548 = vld [vmem:[#allocation7 + $0x1c] sm:$0xf]
    %v549 = vld [vmem:[#allocation7 + $0x20] sm:$0xf]
    %v550 = vld [vmem:[#allocation7 + $0x24] sm:$0xf]
    %v551 = vld [vmem:[#allocation7 + $0x28] sm:$0xf]
    %v552 = vld [vmem:[#allocation7 + $0x2c] sm:$0xf]
    %v553 = vld [vmem:[#allocation7 + $0x30] sm:$0xf]
    %v554 = vld [vmem:[#allocation7 + $0x34] sm:$0xf]
    %v555 = vld [vmem:[#allocation7 + $0x38] sm:$0xf]
    %v556 = vld [vmem:[#allocation7 + $0x3c] sm:$0xf]
    %v557 = vld [vmem:[%s7] sm:$0x1]
    %v559 = vlaneseq
    %v560 = vshrl.u32 %v559, 7
    %v561 = vsub.s32 0, %v560
    %v562 = vrot.slane %v557, %v561
    %v580 = vunpack.c.l.b16 %v541
    %v581 = vunpack.c.l.b16 %v542
    %v582 = vunpack.c.l.b16 %v543
    %v583 = vunpack.c.l.b16 %v544
    %v584 = vunpack.c.l.b16 %v545
    %v585 = vunpack.c.l.b16 %v546
    %v586 = vunpack.c.l.b16 %v547
    %v587 = vunpack.c.l.b16 %v548
    %v588 = vunpack.c.l.b16 %v549
    %v589 = vunpack.c.l.b16 %v550
    %v590 = vunpack.c.l.b16 %v551
    %v591 = vunpack.c.l.b16 %v552
    %v592 = vunpack.c.l.b16 %v553
    %v593 = vunpack.c.l.b16 %v554
    %v594 = vunpack.c.l.b16 %v555
    %v595 = vunpack.c.l.b16 %v556
    %v596 = vpack.c.b16 %v581, %v580
    %v597 = vpack.c.b16 %v583, %v582
    %v598 = vpack.c.b16 %v585, %v584
    %v599 = vpack.c.b16 %v587, %v586
    %v600 = vpack.c.b16 %v589, %v588
    %v601 = vpack.c.b16 %v591, %v590
    %v602 = vpack.c.b16 %v593, %v592
    %v603 = vpack.c.b16 %v595, %v594
    %612 = vmatprep.subr.bf16.mxu0 0
    %613 = vmatpush1.bf16.msra.mxu0 %v596
    %614 = vmatprep.subr.bf16.mxu0 0
    %615 = vmatpush1.bf16.msra.mxu0 %v597
    %616 = vmatprep.subr.bf16.mxu0 0
    %617 = vmatpush1.bf16.msra.mxu0 %v598
    %618 = vmatprep.subr.bf16.mxu0 0
    %619 = vmatpush1.bf16.msra.mxu0 %v599
    %620 = vmatprep.subr.bf16.mxu0 0
    %621 = vmatpush1.bf16.msra.mxu0 %v600
    %622 = vmatprep.subr.bf16.mxu0 0
    %623 = vmatpush1.bf16.msra.mxu0 %v601
    %624 = vmatprep.subr.bf16.mxu0 0
    %625 = vmatpush1.bf16.msra.mxu0 %v602
    %626 = vmatprep.subr.bf16.mxu0 0
    %627 = vmatpush1.bf16.msra.mxu0 %v603
    %628 = vmatprep.subr.bf16.mxu0 0
    %629 = vmatpush1.bf16.msra.mxu0 0
    %630 = vmatprep.subr.bf16.mxu0 0
    %631 = vmatpush1.bf16.msra.mxu0 0
    %632 = vmatprep.subr.bf16.mxu0 0
    %633 = vmatpush1.bf16.msra.mxu0 0
    %634 = vmatprep.subr.bf16.mxu0 0
    %635 = vmatpush1.bf16.msra.mxu0 0
    %636 = vmatprep.subr.bf16.mxu0 0
    %637 = vmatpush1.bf16.msra.mxu0 0
    %638 = vmatprep.subr.bf16.mxu0 0
    %639 = vmatpush1.bf16.msra.mxu0 0
    %640 = vmatprep.subr.bf16.mxu0 0
    %641 = vmatpush1.bf16.msra.mxu0 0
    %642 = vmatprep.subr.bf16.mxu0 0
    %643 = vmatpush1.bf16.msra.mxu0 0
    %644 = vmatprep.mubr.bf16.mxu0 0
    %645 = vmatmul.mubr.bf16.gmra.mrb[0].mxu0 %v533
    %v646 = vpop.f32.mrb[0].mxu0
    %v647 = vadd.f32 %v562, %v646
    %v648 = vpop.f32.mrb[0].mxu0
    %v649 = vpop.f32.mrb[0].mxu0
    %v650 = vadd.f32 %v562, %v649
    %v651 = vpop.f32.mrb[0].mxu0
    %652 = vmatprep.mubr.bf16.mxu0 0
    %653 = vmatmul.mubr.bf16.gmra.mrb[0].mxu0 %v534
    %v654 = vpop.f32.mrb[0].mxu0
    %v655 = vadd.f32 %v562, %v654
    %v656 = vpop.f32.mrb[0].mxu0
    %v657 = vpop.f32.mrb[0].mxu0
    %v658 = vadd.f32 %v562, %v657
    %v659 = vpop.f32.mrb[0].mxu0
    %660 = vmatprep.mubr.bf16.mxu0 0
    %661 = vmatmul.mubr.bf16.gmra.mrb[0].mxu0 %v535
    %v662 = vpop.f32.mrb[0].mxu0
    %v663 = vadd.f32 %v562, %v662
    %v664 = vpop.f32.mrb[0].mxu0
    %v665 = vpop.f32.mrb[0].mxu0
    %v666 = vadd.f32 %v562, %v665
    %v667 = vpop.f32.mrb[0].mxu0
    %668 = vmatprep.mubr.bf16.mxu0 0
    %669 = vmatmul.mubr.bf16.gmra.mrb[0].mxu0 %v536
    %v670 = vpop.f32.mrb[0].mxu0
    %v671 = vadd.f32 %v562, %v670
    %v672 = vpop.f32.mrb[0].mxu0
    %v673 = vpop.f32.mrb[0].mxu0
    %v674 = vadd.f32 %v562, %v673
    %v675 = vpop.f32.mrb[0].mxu0
    %676 = vmatprep.mubr.bf16.mxu0 0
    %677 = vmatmul.mubr.bf16.gmra.mrb[0].mxu0 %v537
    %v678 = vpop.f32.mrb[0].mxu0
    %v679 = vadd.f32 %v562, %v678
    %v680 = vpop.f32.mrb[0].mxu0
    %v681 = vpop.f32.mrb[0].mxu0
    %v682 = vadd.f32 %v562, %v681
    %v683 = vpop.f32.mrb[0].mxu0
    %684 = vmatprep.mubr.bf16.mxu0 0
    %685 = vmatmul.mubr.bf16.gmra.mrb[0].mxu0 %v538
    %v686 = vpop.f32.mrb[0].mxu0
    %v687 = vadd.f32 %v562, %v686
    %v688 = vpop.f32.mrb[0].mxu0
    %v689 = vpop.f32.mrb[0].mxu0
    %v690 = vadd.f32 %v562, %v689
    %v691 = vpop.f32.mrb[0].mxu0
    %692 = vmatprep.mubr.bf16.mxu0 0
    %693 = vmatmul.mubr.bf16.gmra.mrb[0].mxu0 %v539
    %v694 = vpop.f32.mrb[0].mxu0
    %v695 = vadd.f32 %v562, %v694
    %v696 = vpop.f32.mrb[0].mxu0
    %v697 = vpop.f32.mrb[0].mxu0
    %v698 = vadd.f32 %v562, %v697
    %v699 = vpop.f32.mrb[0].mxu0
    %700 = vmatprep.mubr.bf16.mxu0 0
    %701 = vmatmul.mubr.bf16.gmra.mrb[0].mxu0 %v540
    %v702 = vpop.f32.mrb[0].mxu0
    %v703 = vadd.f32 %v562, %v702
    %v704 = vpop.f32.mrb[0].mxu0
    %v705 = vpop.f32.mrb[0].mxu0
    %v706 = vadd.f32 %v562, %v705
    %v707 = vpop.f32.mrb[0].mxu0
    %708 = vdwg.mxu0
    %v709 = vpack.c.bf16 %v650, %v647
    %v710 = vpack.c.bf16 %v658, %v655
    %v711 = vpack.c.bf16 %v666, %v663
    %v712 = vpack.c.bf16 %v674, %v671
    %v713 = vpack.c.bf16 %v682, %v679
    %v714 = vpack.c.bf16 %v690, %v687
    %v715 = vpack.c.bf16 %v698, %v695
    %v716 = vpack.c.bf16 %v706, %v703
    %v717 = vunpack.c.l.bf16 %v709
    %v718 = vunpack.c.h.bf16 %v709
    %v719 = vunpack.c.l.bf16 %v710
    %v720 = vunpack.c.h.bf16 %v710
    %v721 = vunpack.c.l.bf16 %v711
    %v722 = vunpack.c.h.bf16 %v711
    %v723 = vunpack.c.l.bf16 %v712
    %v724 = vunpack.c.h.bf16 %v712
    %v725 = vunpack.c.l.bf16 %v713
    %v726 = vunpack.c.h.bf16 %v713
    %v727 = vunpack.c.l.bf16 %v714
    %v728 = vunpack.c.h.bf16 %v714
    %v729 = vunpack.c.l.bf16 %v715
    %v730 = vunpack.c.h.bf16 %v715
    %v731 = vunpack.c.l.bf16 %v716
    %v732 = vunpack.c.h.bf16 %v716
    %v733 = vmul.f32 %v717, %v717
    %v734 = vmul.f32 %v718, %v718
    %v735 = vmul.f32 %v719, %v719
    %v736 = vmul.f32 %v720, %v720
    %v737 = vmul.f32 %v721, %v721
    %v738 = vmul.f32 %v722, %v722
    %v739 = vmul.f32 %v723, %v723
    %v740 = vmul.f32 %v724, %v724
    %v741 = vmul.f32 %v725, %v725
    %v742 = vmul.f32 %v726, %v726
    %v743 = vmul.f32 %v727, %v727
    %v744 = vmul.f32 %v728, %v728
    %v745 = vmul.f32 %v729, %v729
    %v746 = vmul.f32 %v730, %v730
    %v747 = vmul.f32 %v731, %v731
    %v748 = vmul.f32 %v732, %v732
    %749 = vadd.xlane.f32.xlu0 %v733
    %v750 = vpop.xlane.xlu0 %749
    %751 = vadd.xlane.f32.xlu0 %v734
    %v752 = vpop.xlane.xlu0 %751
    %753 = vadd.xlane.f32.xlu0 %v735
    %v754 = vpop.xlane.xlu0 %753
    %755 = vadd.xlane.f32.xlu0 %v736
    %v756 = vpop.xlane.xlu0 %755
    %757 = vadd.xlane.f32.xlu0 %v737
    %v758 = vpop.xlane.xlu0 %757
    %759 = vadd.xlane.f32.xlu0 %v738
    %v760 = vpop.xlane.xlu0 %759
    %761 = vadd.xlane.f32.xlu0 %v739
    %v762 = vpop.xlane.xlu0 %761
    %763 = vadd.xlane.f32.xlu0 %v740
    %v764 = vpop.xlane.xlu0 %763
    %765 = vadd.xlane.f32.xlu0 %v741
    %v766 = vpop.xlane.xlu0 %765
    %767 = vadd.xlane.f32.xlu0 %v742
    %v768 = vpop.xlane.xlu0 %767
    %769 = vadd.xlane.f32.xlu0 %v743
    %v770 = vpop.xlane.xlu0 %769
    %771 = vadd.xlane.f32.xlu0 %v744
    %v772 = vpop.xlane.xlu0 %771
    %773 = vadd.xlane.f32.xlu0 %v745
    %v774 = vpop.xlane.xlu0 %773
    %775 = vadd.xlane.f32.xlu0 %v746
    %v776 = vpop.xlane.xlu0 %775
    %777 = vadd.xlane.f32.xlu0 %v747
    %v778 = vpop.xlane.xlu0 %777
    %779 = vadd.xlane.f32.xlu0 %v748
    %v780 = vpop.xlane.xlu0 %779
    %v781 = vld [vmem:[#allocation2] sm:$0xf]
    %782 = vmatprep.subr.bf16.mxu0 0
    %783 = vmatpush1.bf16.xpose.msra.mxu0 %v709
    %784 = vmatprep.subr.bf16.mxu0 0
    %785 = vmatpush1.bf16.xpose.msra.mxu0 %v710
    %786 = vmatprep.subr.bf16.mxu0 0
    %787 = vmatpush1.bf16.xpose.msra.mxu0 %v711
    %788 = vmatprep.subr.bf16.mxu0 0
    %789 = vmatpush1.bf16.xpose.msra.mxu0 %v712
    %790 = vmatprep.subr.bf16.mxu0 0
    %791 = vmatpush1.bf16.xpose.msra.mxu0 %v713
    %792 = vmatprep.subr.bf16.mxu0 0
    %793 = vmatpush1.bf16.xpose.msra.mxu0 %v714
    %794 = vmatprep.subr.bf16.mxu0 0
    %795 = vmatpush1.bf16.xpose.msra.mxu0 %v715
    %796 = vmatprep.subr.bf16.mxu0 0
    %797 = vmatpush1.bf16.xpose.msra.mxu0 %v716
    %798 = vmatprep.subr.bf16.mxu0 0
    %799 = vmatpush1.bf16.xpose.msra.mxu0 0
    %800 = vmatprep.subr.bf16.mxu0 0
    %801 = vmatpush1.bf16.xpose.msra.mxu0 0
    %802 = vmatprep.subr.bf16.mxu0 0
    %803 = vmatpush1.bf16.xpose.msra.mxu0 0
    %804 = vmatprep.subr.bf16.mxu0 0
    %805 = vmatpush1.bf16.xpose.msra.mxu0 0
    %806 = vmatprep.subr.bf16.mxu0 0
    %807 = vmatpush1.bf16.xpose.msra.mxu0 0
    %808 = vmatprep.subr.bf16.mxu0 0
    %809 = vmatpush1.bf16.xpose.msra.mxu0 0
    %810 = vmatprep.subr.bf16.mxu0 0
    %811 = vmatpush1.bf16.xpose.msra.mxu0 0
    %812 = vmatprep.subr.bf16.mxu0 0
    %813 = vmatpush1.bf16.xpose.msra.mxu0 0
    %814 = vmatprep.mubr.bf16.mxu0 0
    %815 = vmatmul.mubr.bf16.gmra.mrb[0].mxu0 %v781
    %v816 = vpop.f32.mrb[0].mxu0
    %v817 = vadd.f32 0.0, %v816
    %v818 = vpop.f32.mrb[0].mxu0
    %v819 = vpop.f32.mrb[0].mxu0
    %v820 = vpop.f32.mrb[0].mxu0
    %821 = vdwg.mxu0
    %v822 = vld [vmem:[#allocation3] sm:$0xff]
    %824 = vset.pattern.permute.xlu0 0
    %825 = vperm.xlu0 %824, %v822
    %v826 = vpop.permute.xlu0 %825
    %v844 = vlaneseq
    %v845 = vand.u32 %v844, 127
    %v846 = vlaneseq
    %v847 = vshrl.u32 %v846, 7
    %v848 = vsub.s32 %v845, %v847
    %v849 = vrot.slane %v750, %v848
    %v850 = vadd.s32 %v845, 4294967288
    %v851 = vlaneseq
    %v852 = vshrl.u32 %v851, 7
    %v853 = vsub.s32 %v850, %v852
    %v854 = vrot.slane %v752, %v853
    %vm855 = vcmask 130112
    %v856 = vsel %vm855, %v854, %v849
    %v857 = vadd.s32 %v845, 4294967280
    %v858 = vlaneseq
    %v859 = vshrl.u32 %v858, 7
    %v860 = vsub.s32 %v857, %v859
    %v861 = vrot.slane %v754, %v860
    %vm862 = vcmask 195712
    %v863 = vsel %vm862, %v861, %v856
    %v864 = vadd.s32 %v845, 4294967272
    %v865 = vlaneseq
    %v866 = vshrl.u32 %v865, 7
    %v867 = vsub.s32 %v864, %v866
    %v868 = vrot.slane %v756, %v867
    %vm869 = vcmask 261312
    %v870 = vsel %vm869, %v868, %v863
    %v871 = vadd.s32 %v845, 4294967264
    %v872 = vlaneseq
    %v873 = vshrl.u32 %v872, 7
    %v874 = vsub.s32 %v871, %v873
    %v875 = vrot.slane %v758, %v874
    %vm876 = vcmask 326912
    %v877 = vsel %vm876, %v875, %v870
    %v878 = vadd.s32 %v845, 4294967256
    %v879 = vlaneseq
    %v880 = vshrl.u32 %v879, 7
    %v881 = vsub.s32 %v878, %v880
    %v882 = vrot.slane %v760, %v881
    %vm883 = vcmask 392512
    %v884 = vsel %vm883, %v882, %v877
    %v885 = vadd.s32 %v845, 4294967248
    %v886 = vlaneseq
    %v887 = vshrl.u32 %v886, 7
    %v888 = vsub.s32 %v885, %v887
    %v889 = vrot.slane %v762, %v888
    %vm890 = vcmask 458112
    %v891 = vsel %vm890, %v889, %v884
    %v892 = vadd.s32 %v845, 4294967240
    %v893 = vlaneseq
    %v894 = vshrl.u32 %v893, 7
    %v895 = vsub.s32 %v892, %v894
    %v896 = vrot.slane %v764, %v895
    %vm897 = vcmask 523712
    %v898 = vsel %vm897, %v896, %v891
    %v899 = vadd.s32 %v845, 4294967232
    %v900 = vlaneseq
    %v901 = vshrl.u32 %v900, 7
    %v902 = vsub.s32 %v899, %v901
    %v903 = vrot.slane %v766, %v902
    %vm904 = vcmask 589312
    %v905 = vsel %vm904, %v903, %v898
    %v906 = vadd.s32 %v845, 4294967224
    %v907 = vlaneseq
    %v908 = vshrl.u32 %v907, 7
    %v909 = vsub.s32 %v906, %v908
    %v910 = vrot.slane %v768, %v909
    %vm911 = vcmask 654912
    %v912 = vsel %vm911, %v910, %v905
    %v913 = vadd.s32 %v845, 4294967216
    %v914 = vlaneseq
    %v915 = vshrl.u32 %v914, 7
    %v916 = vsub.s32 %v913, %v915
    %v917 = vrot.slane %v770, %v916
    %vm918 = vcmask 720512
    %v919 = vsel %vm918, %v917, %v912
    %v920 = vadd.s32 %v845, 4294967208
    %v921 = vlaneseq
    %v922 = vshrl.u32 %v921, 7
    %v923 = vsub.s32 %v920, %v922
    %v924 = vrot.slane %v772, %v923
    %vm925 = vcmask 786112
    %v926 = vsel %vm925, %v924, %v919
    %v927 = vadd.s32 %v845, 4294967200
    %v928 = vlaneseq
    %v929 = vshrl.u32 %v928, 7
    %v930 = vsub.s32 %v927, %v929
    %v931 = vrot.slane %v774, %v930
    %vm932 = vcmask 851712
    %v933 = vsel %vm932, %v931, %v926
    %v934 = vadd.s32 %v845, 4294967192
    %v935 = vlaneseq
    %v936 = vshrl.u32 %v935, 7
    %v937 = vsub.s32 %v934, %v936
    %v938 = vrot.slane %v776, %v937
    %vm939 = vcmask 917312
    %v940 = vsel %vm939, %v938, %v933
    %v941 = vadd.s32 %v845, 4294967184
    %v942 = vlaneseq
    %v943 = vshrl.u32 %v942, 7
    %v944 = vsub.s32 %v941, %v943
    %v945 = vrot.slane %v778, %v944
    %vm946 = vcmask 982912
    %v947 = vsel %vm946, %v945, %v940
    %v948 = vadd.s32 %v845, 4294967176
    %v949 = vlaneseq
    %v950 = vshrl.u32 %v949, 7
    %v951 = vsub.s32 %v948, %v950
    %v952 = vrot.slane %v780, %v951
    %vm953 = vcmask 1048512
    %v954 = vsel %vm953, %v952, %v947
    %vm955 = vcmask 1042434
    %v956 = vsel %vm955, %v954, %v954
    %vm957 = vcmask 1043459
    %v958 = vsel %vm957, %v954, %v956
    %vm959 = vcmask 1044484
    %v960 = vsel %vm959, %v954, %v958
    %vm961 = vcmask 1045509
    %v962 = vsel %vm961, %v954, %v960
    %vm963 = vcmask 1046534
    %v964 = vsel %vm963, %v954, %v962
    %vm965 = vcmask 1047559
    %v966 = vsel %vm965, %v954, %v964
    %v968 = vadd.f32 %v826, %v966
    %v969 = vmul.f32 %v817, 2.0
    %v970 = vsub.f32 %v968, %v969
    %v971 = vmax.f32 %v970, 0.0
    %v972 = vrsqrt.pop %v971
    %v973 = vmul.f32 %v971, %v972
    %vm974 = vcmp.eq.f32.partialorder %v971, inf
    %v975 = vsel %vm974, %v971, %v973
    %vm976 = vcmp.eq.f32.partialorder %v971, 0.0
    %v977 = vand.u32 %v971, 2147483648
    %v978 = vsel %vm976, %v977, %v975
    %v979 = vsub.f32 0.0, %v978
    %v980 = vld [vmem:[%s3] sm:$0x1]
    %v982 = vlaneseq
    %v983 = vshrl.u32 %v982, 7
    %v984 = vsub.s32 0, %v983
    %v985 = vrot.slane %v980, %v984
    %v987 = vadd.f32 %v979, %v985
    %v988 = vld [vmem:[#allocation4] sm:$0xff]
    %989 = vmax.xlane.f32.xlu0 %v987
    %v990 = vpop.xlane.xlu0 %989
    %v991 = vmax.f32 %v988, %v990
    %v992 = vsub.f32 %v988, %v991
    %v993 = vmul.f32 %v992, 1.442695
    %v994 = vpow.pop %v993
    %996 = vset.pattern.permute.xlu0 0
    %997 = vperm.xlu0 %996, %v991
    %v998 = vpop.permute.xlu0 %997
    %v1000 = vsub.f32 %v987, %v998
    %v1001 = vmul.f32 %v1000, 1.442695
    %v1002 = vpow.pop %v1001
    %v1003 = vld [vmem:[#allocation5] sm:$0xff]
    %v1004 = vmul.f32 %v994, %v1003
    %1005 = vadd.xlane.f32.xlu0 %v1002
    %v1006 = vpop.xlane.xlu0 %1005
    %v1007 = vadd.f32 %v1004, %v1006
    %vm1008 = vcmask 7168
    %1009 = vst.msk [vmem:[#allocation5] sm:$0xff] %vm1008, %v1007
    %v1010 = vld [vmem:[#allocation6] sm:$0xff]
    %1012 = vset.pattern.permute.xlu0 0
    %1013 = vperm.xlu0 %1012, %v994
    %v1014 = vpop.permute.xlu0 %1013
    %v1016 = vmul.f32 %v1014, %v1010
    %v1017 = vld [vmem:[%s2] sm:$0xff]
    %v1018 = vld [vmem:[%s2 + $0x8] sm:$0xff]
    %v1019 = vld [vmem:[%s2 + $0x10] sm:$0xff]
    %v1020 = vld [vmem:[%s2 + $0x18] sm:$0xff]
    %v1021 = vld [vmem:[%s2 + $0x20] sm:$0xff]
    %v1022 = vld [vmem:[%s2 + $0x28] sm:$0xff]
    %v1023 = vld [vmem:[%s2 + $0x30] sm:$0xff]
    %v1024 = vld [vmem:[%s2 + $0x38] sm:$0xff]
    %v1025 = vld [vmem:[%s2 + $0x40] sm:$0xff]
    %v1026 = vld [vmem:[%s2 + $0x48] sm:$0xff]
    %v1027 = vld [vmem:[%s2 + $0x50] sm:$0xff]
    %v1028 = vld [vmem:[%s2 + $0x58] sm:$0xff]
    %v1029 = vld [vmem:[%s2 + $0x60] sm:$0xff]
    %v1030 = vld [vmem:[%s2 + $0x68] sm:$0xff]
    %v1031 = vld [vmem:[%s2 + $0x70] sm:$0xff]
    %v1032 = vld [vmem:[%s2 + $0x78] sm:$0xff]
    %1033 = vmatprep.subr.mxu0 0.0
    %1034 = vmatpush1.msra.mxu0 %v1017
    %1035 = vmatprep.subr.mxu0 0.0
    %1036 = vmatpush1.msra.mxu0 %v1018
    %1037 = vmatprep.subr.mxu0 0.0
    %1038 = vmatpush1.msra.mxu0 %v1019
    %1039 = vmatprep.subr.mxu0 0.0
    %1040 = vmatpush1.msra.mxu0 %v1020
    %1041 = vmatprep.subr.mxu0 0.0
    %1042 = vmatpush1.msra.mxu0 %v1021
    %1043 = vmatprep.subr.mxu0 0.0
    %1044 = vmatpush1.msra.mxu0 %v1022
    %1045 = vmatprep.subr.mxu0 0.0
    %1046 = vmatpush1.msra.mxu0 %v1023
    %1047 = vmatprep.subr.mxu0 0.0
    %1048 = vmatpush1.msra.mxu0 %v1024
    %1049 = vmatprep.subr.mxu0 0.0
    %1050 = vmatpush1.msra.mxu0 %v1025
    %1051 = vmatprep.subr.mxu0 0.0
    %1052 = vmatpush1.msra.mxu0 %v1026
    %1053 = vmatprep.subr.mxu0 0.0
    %1054 = vmatpush1.msra.mxu0 %v1027
    %1055 = vmatprep.subr.mxu0 0.0
    %1056 = vmatpush1.msra.mxu0 %v1028
    %1057 = vmatprep.subr.mxu0 0.0
    %1058 = vmatpush1.msra.mxu0 %v1029
    %1059 = vmatprep.subr.mxu0 0.0
    %1060 = vmatpush1.msra.mxu0 %v1030
    %1061 = vmatprep.subr.mxu0 0.0
    %1062 = vmatpush1.msra.mxu0 %v1031
    %1063 = vmatprep.subr.mxu0 0.0
    %1064 = vmatpush1.msra.mxu0 %v1032
    %1065 = vmatprep.subr.mxu0 0.0
    %1066 = vmatpush1.msra.mxu0 0.0
    %1067 = vmatprep.subr.mxu0 0.0
    %1068 = vmatpush1.msra.mxu0 0.0
    %1069 = vmatprep.subr.mxu0 0.0
    %1070 = vmatpush1.msra.mxu0 0.0
    %1071 = vmatprep.subr.mxu0 0.0
    %1072 = vmatpush1.msra.mxu0 0.0
    %1073 = vmatprep.subr.mxu0 0.0
    %1074 = vmatpush1.msra.mxu0 0.0
    %1075 = vmatprep.subr.mxu0 0.0
    %1076 = vmatpush1.msra.mxu0 0.0
    %1077 = vmatprep.subr.mxu0 0.0
    %1078 = vmatpush1.msra.mxu0 0.0
    %1079 = vmatprep.subr.mxu0 0.0
    %1080 = vmatpush1.msra.mxu0 0.0
    %1081 = vmatprep.subr.mxu0 0.0
    %1082 = vmatpush1.msra.mxu0 0.0
    %1083 = vmatprep.subr.mxu0 0.0
    %1084 = vmatpush1.msra.mxu0 0.0
    %1085 = vmatprep.subr.mxu0 0.0
    %1086 = vmatpush1.msra.mxu0 0.0
    %1087 = vmatprep.subr.mxu0 0.0
    %1088 = vmatpush1.msra.mxu0 0.0
    %1089 = vmatprep.subr.mxu0 0.0
    %1090 = vmatpush1.msra.mxu0 0.0
    %1091 = vmatprep.subr.mxu0 0.0
    %1092 = vmatpush1.msra.mxu0 0.0
    %1093 = vmatprep.subr.mxu0 0.0
    %1094 = vmatpush1.msra.mxu0 0.0
    %1095 = vmatprep.subr.mxu0 0.0
    %1096 = vmatpush1.msra.mxu0 0.0
    %1097 = vmatprep.mubr.f32.mxu0 0.0
    %1098 = vmatmul.mubr.f32.gmra.mrb[0].mxu0 %v1002
    %v1099 = vpop.f32.mrb[0].mxu0
    %v1100 = vadd.f32 0.0, %v1099
    %v1101 = vpop.f32.mrb[0].mxu0
    %1102 = vdwg.mxu0
    %v1103 = vadd.f32 %v1016, %v1100
    %vm1104 = vcmask 23552
    %1105 = vst.msk [vmem:[#allocation6] sm:$0xff] %vm1104, %v1103
    %1106 = vst.msk [vmem:[#allocation4] sm:$0xff] %vm1008, %v991
    // Predicated region
    $region42: #{tpu_custom_call.1} parent=1 // pred_check
      %p1107 = pneg %p44
    $region43: #{tpu_custom_call.1} parent=1 // pred_check_branch
      %1109 = sbr.rel (%p1107) target = $region45
    $region44: #{tpu_custom_call.1} parent=1 // pred_region
      %v1110 = vld [vmem:[#allocation6] sm:$0xff]
      %v1111 = vld [vmem:[#allocation5] sm:$0xff]
      %1113 = vset.pattern.permute.xlu0 0
      %1114 = vperm.xlu0 %1113, %v1111
      %v1115 = vpop.permute.xlu0 %1114
      %v1117 = vrcp.pop %v1115
      %v1118 = vmul.f32 %v1110, %v1117
      %v1119 = vadd.f32 %v1118, 1e-07
      %v1120 = vlog2.pop %v1119
      %v1121 = vmul.f32 %v1120, 0.6931472
      %1122 = vst.msk [vmem:[%s8] sm:$0xff] %vm1104, %v1121
    $region45: #{tpu_custom_call.1} parent=1 // pred_fallthru
      _
    // Predicated region
    $region46: #{tpu_custom_call.1} parent=1 // pred_check
      _
    $region47: #{tpu_custom_call.1} parent=1 // pred_check_branch
      %1124 = sbr.rel (0) target = $region49
    $region48: #{tpu_custom_call.1} parent=1 // pred_region
      _
    $region49: #{tpu_custom_call.1} parent=1 // pred_fallthru
      _
    // Predicated region
    $region50: #{tpu_custom_call.1} parent=1 // pred_check
      _
    $region51: #{tpu_custom_call.1} parent=1 // pred_check_branch
      %1126 = sbr.rel (0) target = $region53
    $region52: #{tpu_custom_call.1} parent=1 // pred_region
      _
    $region53: #{tpu_custom_call.1} parent=1 // pred_fallthru
      _
    %1127 = vsyncpa [#allocation8], 1

</llo_original>
